<compile_context>
chip_gen: v7x
topology: tpu7x:2x2x1
jax: 0.10.0
libtpu: 0.0.40
codegen_flags: <defaults>
</compile_context>

<pallas_src>
import functools

import jax
import jax.numpy as jnp
from jax import lax
from jax.experimental import pallas as pl
from jax.experimental.pallas import tpu as pltpu


def _round_up(x, m):
    return ((x + m - 1) // m) * m


def _pad_to(x, shape):
    pads = [(0, s - d) for d, s in zip(x.shape, shape)]
    return jnp.pad(x, pads)


# ----------------------------------------------------------------------------
# Pallas kernel.
#   x_ref   : (3B, Dp) stacked [sk ; im_pos ; im_neg], zero-padded on lanes.
#   w2v_ref : (B, Dp)
#   w1_ref  : (Dp, Hsp+Hdp)   fused layer-1 weights [sem L1 | dom L1]
#   b1_ref  : (1,  Hsp+Hdp)
#   w2_ref  : (Hsp+Hdp, Dp+Hdp) fused block-diag layer-2 [sem L2 | dom L2]
#   b2_ref  : (1,  Dp+Hdp)
#   wd3_ref : (1,  Hdp)       last Linear(64,1) as a row
#   bd3_ref : (1,) SMEM scalar
#   out_ref : (1, 128) -> lane 0 = loss_sem, lane 1 = loss_dom, lane 2 = loss_spa
# ----------------------------------------------------------------------------
def _detangled_kernel(x_ref, w2v_ref, w1_ref, b1_ref, w2_ref, b2_ref,
                      wd3_ref, bd3_ref, out_ref, *, batch, d_valid, d_pad):
    B = batch
    Dp = d_pad
    x = x_ref[...]                      # (3B, Dp)
    w2v = w2v_ref[...]                  # (B, Dp)

    # ---------------- fused MLP trunk ----------------------------------------
    # grad_reverse is identity in the forward pass.
    # TODO(synk): nn.Dropout (train mode, p=0.5) treated as identity (eval);
    #             stochastic torch dropout has no deterministic equivalent.
    h1 = jnp.maximum(
        jnp.dot(x, w1_ref[...], preferred_element_type=jnp.float32) + b1_ref[...],
        0.0)                            # (3B, Hsp+Hdp) -- shared ReLU
    z2 = jnp.dot(h1, w2_ref[...], preferred_element_type=jnp.float32) + b2_ref[...]
    m = z2[:, :Dp]                      # semantic map output, no ReLU   (3B, Dp)
    h2 = jnp.maximum(z2[:, Dp:], 0.0)   # domain hidden-2 after ReLU     (3B, Hdp)

    # ---------------- semantic branch (cosine_loss vs w2v) --------------------
    inv_w = lax.rsqrt(jnp.sum(w2v * w2v, axis=1, keepdims=True))        # (B, 1)
    w2v3 = jnp.concatenate([w2v, w2v, w2v], axis=0)                     # (3B, Dp)
    inv_w3 = jnp.concatenate([inv_w, inv_w, inv_w], axis=0)             # (3B, 1)
    dot = jnp.sum(m * w2v3, axis=1, keepdims=True)                      # (3B, 1)
    inv_m = lax.rsqrt(jnp.sum(m * m, axis=1, keepdims=True))            # (3B, 1)
    sem = (1.0 - dot * inv_m * inv_w3) * 0.5                            # (3B, 1)
    # loss_sem = mean_b(sem_sk + sem_pos + sem_neg) = sum(sem) / B
    loss_sem = jnp.sum(sem, axis=0, keepdims=True) * (1.0 / B)          # (1, 1)

    # ---------------- domain branch (sigmoid + BCE) ---------------------------
    logit = jnp.sum(h2 * wd3_ref[...], axis=1, keepdims=True) + bd3_ref[0]  # (3B,1)
    # target = 0 for the first B rows (sketch), 1 for the remaining 2B (images).
    # BCE(sigmoid(z), t) with torch's -100 log clamp:
    #   t = 1 -> min(softplus(-z), 100);  t = 0 -> min(softplus(z), 100)
    row = lax.broadcasted_iota(jnp.int32, (3 * B, 1), 0)
    z = jnp.where(row < B, logit, -logit)
    softplus = jnp.maximum(z, 0.0) + jnp.log(1.0 + jnp.exp(-jnp.abs(z)))
    bce = jnp.minimum(softplus, 100.0)                                  # (3B, 1)
    # loss_dom = (mean(bce_sk) + mean(bce_pos) + mean(bce_neg)) / 3 = sum / (3B)
    loss_dom = jnp.sum(bce, axis=0, keepdims=True) * (1.0 / (3 * B))    # (1, 1)

    # ---------------- triplet margin branch ------------------------------------
    # nn.TripletMarginLoss(margin=1.0, p=2); torch pairwise_distance eps=1e-6.
    sk = x[0:B]
    pos = x[B:2 * B]
    neg = x[2 * B:3 * B]
    lane = lax.broadcasted_iota(jnp.int32, (B, Dp), 1)
    valid = lane < d_valid                                    # mask padded lanes
    eps = 1e-6
    dpv = jnp.where(valid, sk - pos + eps, 0.0)
    dnv = jnp.where(valid, sk - neg + eps, 0.0)
    d_pos = jnp.sqrt(jnp.sum(dpv * dpv, axis=1, keepdims=True))
    d_neg = jnp.sqrt(jnp.sum(dnv * dnv, axis=1, keepdims=True))
    spa = jnp.maximum(d_pos - d_neg + 1.0, 0.0)                         # (B, 1)
    loss_spa = jnp.sum(spa, axis=0, keepdims=True) * (1.0 / B)          # (1, 1)

    # ---------------- single lane-dense store ----------------------------------
    out_lane = lax.broadcasted_iota(jnp.int32, (1, 128), 1)
    out_ref[...] = jnp.where(out_lane == 0, loss_sem,
                   jnp.where(out_lane == 1, loss_dom,
                   jnp.where(out_lane == 2, loss_spa, 0.0)))


# ----------------------------------------------------------------------------
# Wrapper module (plain-JAX glue: deterministic init, weights padded + fused at
# init, per-call activation padding + stacking, weighted sum of 3 scalars).
# ----------------------------------------------------------------------------
class DetangledJoinDomainLoss:
    SEM_HIDDEN = 300   # hardcoded in SemanticLoss (Linear(input,300), Linear(300,input))
    DOM_HIDDEN = 64    # hardcoded in DomainLoss

    def __init__(self, semantic_dim=300, w_sem=0.25, w_dom=0.25, w_spa=0.25,
                 lambd=0.5, key=None):
        self.semantic_dim = semantic_dim
        self.w_sem = w_sem
        self.w_dom = w_dom
        self.w_spa = w_spa
        self.lambd = lambd   # only scales grad_reverse in backward; no fwd effect

        if key is None:
            key = jax.random.PRNGKey(0)
        keys = jax.random.split(key, 5)

        def linear(k, fan_in, fan_out):
            # mimic torch.nn.Linear default init: U(-1/sqrt(fan_in), 1/sqrt(fan_in))
            kw, kb = jax.random.split(k)
            bound = 1.0 / (fan_in ** 0.5)
            w = jax.random.uniform(kw, (fan_in, fan_out), jnp.float32, -bound, bound)
            b = jax.random.uniform(kb, (1, fan_out), jnp.float32, -bound, bound)
            return w, b

        D, Hs, Hd = semantic_dim, self.SEM_HIDDEN, self.DOM_HIDDEN
        Dp, Hsp, Hdp = _round_up(D, 128), _round_up(Hs, 128), _round_up(Hd, 128)
        self.Dp, self.Hsp, self.Hdp = Dp, Hsp, Hdp

        ws1, bs1 = linear(keys[0], D, Hs)    # SemanticLoss.map layer 1
        ws2, bs2 = linear(keys[1], Hs, D)    # SemanticLoss.map layer 2
        wd1, bd1 = linear(keys[2], D, Hd)    # DomainLoss.map layer 1
        wd2, bd2 = linear(keys[3], Hd, Hd)   # DomainLoss.map layer 2
        wd3, bd3 = linear(keys[4], Hd, 1)    # DomainLoss.map layer 3 (to logit)

        # ---- fused layer 1: [sem L1 | dom L1], shared input x, shared ReLU ----
        Hc1 = Hsp + Hdp
        w1 = jnp.zeros((Dp, Hc1), jnp.float32)
        w1 = w1.at[:D, :Hs].set(ws1)
        w1 = w1.at[:D, Hsp:Hsp + Hd].set(wd1)
        b1 = jnp.zeros((1, Hc1), jnp.float32)
        b1 = b1.at[:, :Hs].set(bs1)
        b1 = b1.at[:, Hsp:Hsp + Hd].set(bd1)

        # ---- fused layer 2: block-diagonal [sem L2 ; dom L2] (zero blocks exact)
        Hc2 = Dp + Hdp
        w2 = jnp.zeros((Hc1, Hc2), jnp.float32)
        w2 = w2.at[:Hs, :D].set(ws2)
        w2 = w2.at[Hsp:Hsp + Hd, Dp:Dp + Hd].set(wd2)
        b2 = jnp.zeros((1, Hc2), jnp.float32)
        b2 = b2.at[:, :D].set(bs2)
        b2 = b2.at[:, Dp:Dp + Hd].set(bd2)

        self.w1, self.b1 = w1, b1
        self.w2, self.b2 = w2, b2
        self.wd3 = _pad_to(wd3.T, (1, Hdp))   # last Linear(64,1) as a (1, Hdp) row
        self.bd3 = bd3.reshape((1,))          # scalar bias -> SMEM

    def __call__(self, sk_sem, im_pos_sem, im_neg_sem, w2v, epoch):
        del epoch  # lmb only scales grad_reverse (backward); identity in forward
        B, D = sk_sem.shape
        Dp = self.Dp

        # Only per-call work: stack + pad the activations (weights are pre-fused).
        x = jnp.concatenate([sk_sem, im_pos_sem, im_neg_sem], axis=0).astype(jnp.float32)
        x_p = _pad_to(x, (3 * B, Dp))
        w2v_p = _pad_to(w2v.astype(jnp.float32), (B, Dp))

        vmem = pl.BlockSpec(memory_space=pltpu.MemorySpace.VMEM)
        smem = pl.BlockSpec(memory_space=pltpu.MemorySpace.SMEM)
        kernel = functools.partial(_detangled_kernel, batch=B, d_valid=D, d_pad=Dp)

        out = pl.pallas_call(
            kernel,
            out_shape=jax.ShapeDtypeStruct((1, 128), jnp.float32),
            in_specs=[vmem, vmem,          # x, w2v
                      vmem, vmem,          # fused layer 1
                      vmem, vmem,          # fused layer 2
                      vmem,                # wd3 row
                      smem],               # bd3 scalar
            out_specs=vmem,
        )(x_p, w2v_p, self.w1, self.b1, self.w2, self.b2, self.wd3, self.bd3)

        loss_sem = out[0, 0]
        loss_dom = out[0, 1]
        loss_spa = out[0, 2]
        loss = self.w_sem * loss_sem + self.w_dom * loss_dom + self.w_spa * loss_spa
        return {'net': loss, 'loss_sem': loss_sem,
                'loss_dom': loss_dom, 'loss_spa': loss_spa}


if __name__ == "__main__":
    key = jax.random.PRNGKey(0)
    k1, k2, k3, k4, kp = jax.random.split(key, 5)

    B, D = 8, 300   # small batch, default semantic_dim from the module
    sk_sem = jax.random.normal(k1, (B, D), jnp.float32)
    im_pos_sem = jax.random.normal(k2, (B, D), jnp.float32)
    im_neg_sem = jax.random.normal(k3, (B, D), jnp.float32)
    w2v = jax.random.normal(k4, (B, D), jnp.float32)

    model = DetangledJoinDomainLoss(semantic_dim=D, key=kp)
    out = model(sk_sem, im_pos_sem, im_neg_sem, w2v, epoch=10)
    jax.block_until_ready(out['net'])

    # sanity: all outputs finite
    assert all(bool(jnp.isfinite(v)) for v in out.values())
    print("KERNEL_OK")
</pallas_src>

<mosaic_0001>
module attributes {stable_mosaic.version = 11 : i64} {
  func.func @_detangled_kernel(%arg0: memref<24x384xf32, #tpu.memory_space<vmem>>, %arg1: memref<8x384xf32, #tpu.memory_space<vmem>>, %arg2: memref<384x512xf32, #tpu.memory_space<vmem>>, %arg3: memref<1x512xf32, #tpu.memory_space<vmem>>, %arg4: memref<512x512xf32, #tpu.memory_space<vmem>>, %arg5: memref<1x512xf32, #tpu.memory_space<vmem>>, %arg6: memref<1x128xf32, #tpu.memory_space<vmem>>, %arg7: memref<1xf32, #tpu.memory_space<smem>>, %arg8: memref<1x128xf32, #tpu.memory_space<vmem>>) attributes {dimension_semantics = [], scalar_prefetch = 0 : i64, scratch_operands = 0 : i64, tpu.core_type = #tpu.core_type<tc>} {
    %c0 = arith.constant 0 : index
    %c0_0 = arith.constant 0 : index
    %0 = vector.load %arg0[%c0, %c0_0] : memref<24x384xf32, #tpu.memory_space<vmem>>, vector<24x384xf32>
    %c0_1 = arith.constant 0 : index
    %c0_2 = arith.constant 0 : index
    %1 = vector.load %arg1[%c0_1, %c0_2] : memref<8x384xf32, #tpu.memory_space<vmem>>, vector<8x384xf32>
    %c0_3 = arith.constant 0 : index
    %c0_4 = arith.constant 0 : index
    %2 = vector.load %arg2[%c0_3, %c0_4] : memref<384x512xf32, #tpu.memory_space<vmem>>, vector<384x512xf32>
    %cst = arith.constant dense<0.000000e+00> : vector<24x512xf32>
    %3 = tpu.matmul %0, %2, %cst {dimension_numbers = #tpu.dot_dimension_numbers<[1], [0], [0], [1], [0, 0, 1, 1], [], []>} : vector<24x384xf32>, vector<384x512xf32>, vector<24x512xf32> -> vector<24x512xf32>
    %c0_5 = arith.constant 0 : index
    %c0_6 = arith.constant 0 : index
    %4 = vector.load %arg3[%c0_5, %c0_6] : memref<1x512xf32, #tpu.memory_space<vmem>>, vector<1x512xf32>
    %5 = vector.broadcast %4 : vector<1x512xf32> to vector<24x512xf32>
    %6 = arith.addf %3, %5 : vector<24x512xf32>
    %cst_7 = arith.constant 0.000000e+00 : f32
    %7 = vector.broadcast %cst_7 : f32 to vector<24x512xf32>
    %8 = arith.maximumf %6, %7 : vector<24x512xf32>
    %c0_8 = arith.constant 0 : index
    %c0_9 = arith.constant 0 : index
    %9 = vector.load %arg4[%c0_8, %c0_9] : memref<512x512xf32, #tpu.memory_space<vmem>>, vector<512x512xf32>
    %cst_10 = arith.constant dense<0.000000e+00> : vector<24x512xf32>
    %10 = tpu.matmul %8, %9, %cst_10 {dimension_numbers = #tpu.dot_dimension_numbers<[1], [0], [0], [1], [0, 0, 1, 1], [], []>} : vector<24x512xf32>, vector<512x512xf32>, vector<24x512xf32> -> vector<24x512xf32>
    %c0_11 = arith.constant 0 : index
    %c0_12 = arith.constant 0 : index
    %11 = vector.load %arg5[%c0_11, %c0_12] : memref<1x512xf32, #tpu.memory_space<vmem>>, vector<1x512xf32>
    %12 = vector.broadcast %11 : vector<1x512xf32> to vector<24x512xf32>
    %13 = arith.addf %10, %12 : vector<24x512xf32>
    %14 = vector.extract_strided_slice %13 {offsets = [0, 0], sizes = [24, 384], strides = [1, 1]} : vector<24x512xf32> to vector<24x384xf32>
    %15 = vector.extract_strided_slice %13 {offsets = [0, 384], sizes = [24, 128], strides = [1, 1]} : vector<24x512xf32> to vector<24x128xf32>
    %cst_13 = arith.constant 0.000000e+00 : f32
    %16 = vector.broadcast %cst_13 : f32 to vector<24x128xf32>
    %17 = arith.maximumf %15, %16 : vector<24x128xf32>
    %18 = arith.mulf %1, %1 : vector<8x384xf32>
    %cst_14 = arith.constant dense<0.000000e+00> : vector<8xf32>
    %19 = vector.multi_reduction <add>, %18, %cst_14 [1] : vector<8x384xf32> to vector<8xf32>
    %20 = vector.shape_cast %19 : vector<8xf32> to vector<8x1xf32>
    %21 = math.rsqrt %20 : vector<8x1xf32>
    %22 = tpu.concatenate %1, %1, %1 in 0 : vector<8x384xf32>, vector<8x384xf32>, vector<8x384xf32> -> vector<24x384xf32>
    %23 = tpu.concatenate %21, %21, %21 in 0 : vector<8x1xf32>, vector<8x1xf32>, vector<8x1xf32> -> vector<24x1xf32>
    %24 = arith.mulf %14, %22 : vector<24x384xf32>
    %cst_15 = arith.constant dense<0.000000e+00> : vector<24xf32>
    %25 = vector.multi_reduction <add>, %24, %cst_15 [1] : vector<24x384xf32> to vector<24xf32>
    %26 = vector.shape_cast %25 : vector<24xf32> to vector<24x1xf32>
    %27 = arith.mulf %14, %14 : vector<24x384xf32>
    %cst_16 = arith.constant dense<0.000000e+00> : vector<24xf32>
    %28 = vector.multi_reduction <add>, %27, %cst_16 [1] : vector<24x384xf32> to vector<24xf32>
    %29 = vector.shape_cast %28 : vector<24xf32> to vector<24x1xf32>
    %30 = math.rsqrt %29 : vector<24x1xf32>
    %31 = arith.mulf %26, %30 : vector<24x1xf32>
    %32 = arith.mulf %31, %23 : vector<24x1xf32>
    %cst_17 = arith.constant 1.000000e+00 : f32
    %33 = vector.broadcast %cst_17 : f32 to vector<24x1xf32>
    %34 = arith.subf %33, %32 : vector<24x1xf32>
    %cst_18 = arith.constant 5.000000e-01 : f32
    %35 = vector.broadcast %cst_18 : f32 to vector<24x1xf32>
    %36 = arith.mulf %34, %35 : vector<24x1xf32>
    %cst_19 = arith.constant dense<0.000000e+00> : vector<1xf32>
    %37 = vector.multi_reduction <add>, %36, %cst_19 [0] : vector<24x1xf32> to vector<1xf32>
    %38 = vector.shape_cast %37 : vector<1xf32> to vector<1x1xf32>
    %cst_20 = arith.constant 1.250000e-01 : f32
    %39 = vector.broadcast %cst_20 : f32 to vector<1x1xf32>
    %40 = arith.mulf %38, %39 : vector<1x1xf32>
    %c0_21 = arith.constant 0 : index
    %c0_22 = arith.constant 0 : index
    %41 = vector.load %arg6[%c0_21, %c0_22] : memref<1x128xf32, #tpu.memory_space<vmem>>, vector<1x128xf32>
    %42 = vector.broadcast %41 : vector<1x128xf32> to vector<24x128xf32>
    %43 = arith.mulf %17, %42 : vector<24x128xf32>
    %cst_23 = arith.constant dense<0.000000e+00> : vector<24xf32>
    %44 = vector.multi_reduction <add>, %43, %cst_23 [1] : vector<24x128xf32> to vector<24xf32>
    %45 = vector.shape_cast %44 : vector<24xf32> to vector<24x1xf32>
    %c0_24 = arith.constant 0 : index
    %46 = memref.load %arg7[%c0_24] : memref<1xf32, #tpu.memory_space<smem>>
    %47 = vector.broadcast %46 : f32 to vector<24x1xf32>
    %48 = arith.addf %45, %47 : vector<24x1xf32>
    %49 = tpu.iota {dimensions = array<i32: 0>} : vector<24x1xi32>
    %c8_i32 = arith.constant 8 : i32
    %50 = vector.broadcast %c8_i32 : i32 to vector<24x1xi32>
    %51 = arith.cmpi slt, %49, %50 : vector<24x1xi32>
    %cst_25 = arith.constant 0.000000e+00 : f32
    %52 = vector.broadcast %cst_25 : f32 to vector<24x1xf32>
    %53 = arith.subf %52, %48 : vector<24x1xf32>
    %54 = arith.select %51, %48, %53 : vector<24x1xi1>, vector<24x1xf32>
    %cst_26 = arith.constant 0.000000e+00 : f32
    %55 = vector.broadcast %cst_26 : f32 to vector<24x1xf32>
    %56 = arith.maximumf %54, %55 : vector<24x1xf32>
    %57 = math.absf %54 : vector<24x1xf32>
    %cst_27 = arith.constant 0.000000e+00 : f32
    %58 = vector.broadcast %cst_27 : f32 to vector<24x1xf32>
    %59 = arith.subf %58, %57 : vector<24x1xf32>
    %60 = math.exp %59 : vector<24x1xf32>
    %cst_28 = arith.constant 1.000000e+00 : f32
    %61 = vector.broadcast %cst_28 : f32 to vector<24x1xf32>
    %62 = arith.addf %61, %60 : vector<24x1xf32>
    %63 = math.log %62 : vector<24x1xf32>
    %64 = arith.addf %56, %63 : vector<24x1xf32>
    %cst_29 = arith.constant 1.000000e+02 : f32
    %65 = vector.broadcast %cst_29 : f32 to vector<24x1xf32>
    %66 = arith.minimumf %64, %65 : vector<24x1xf32>
    %cst_30 = arith.constant dense<0.000000e+00> : vector<1xf32>
    %67 = vector.multi_reduction <add>, %66, %cst_30 [0] : vector<24x1xf32> to vector<1xf32>
    %68 = vector.shape_cast %67 : vector<1xf32> to vector<1x1xf32>
    %cst_31 = arith.constant 0.0416666679 : f32
    %69 = vector.broadcast %cst_31 : f32 to vector<1x1xf32>
    %70 = arith.mulf %68, %69 : vector<1x1xf32>
    %71 = vector.extract_strided_slice %0 {offsets = [0, 0], sizes = [8, 384], strides = [1, 1]} : vector<24x384xf32> to vector<8x384xf32>
    %72 = vector.extract_strided_slice %0 {offsets = [8, 0], sizes = [8, 384], strides = [1, 1]} : vector<24x384xf32> to vector<8x384xf32>
    %73 = vector.extract_strided_slice %0 {offsets = [16, 0], sizes = [8, 384], strides = [1, 1]} : vector<24x384xf32> to vector<8x384xf32>
    %74 = tpu.iota {dimensions = array<i32: 1>} : vector<8x384xi32>
    %c300_i32 = arith.constant 300 : i32
    %75 = vector.broadcast %c300_i32 : i32 to vector<8x384xi32>
    %76 = arith.cmpi slt, %74, %75 : vector<8x384xi32>
    %77 = arith.subf %71, %72 : vector<8x384xf32>
    %cst_32 = arith.constant 9.99999997E-7 : f32
    %78 = vector.broadcast %cst_32 : f32 to vector<8x384xf32>
    %79 = arith.addf %77, %78 : vector<8x384xf32>
    %cst_33 = arith.constant 0.000000e+00 : f32
    %80 = vector.broadcast %cst_33 : f32 to vector<8x384xf32>
    %81 = arith.select %76, %79, %80 : vector<8x384xi1>, vector<8x384xf32>
    %82 = arith.subf %71, %73 : vector<8x384xf32>
    %cst_34 = arith.constant 9.99999997E-7 : f32
    %83 = vector.broadcast %cst_34 : f32 to vector<8x384xf32>
    %84 = arith.addf %82, %83 : vector<8x384xf32>
    %cst_35 = arith.constant 0.000000e+00 : f32
    %85 = vector.broadcast %cst_35 : f32 to vector<8x384xf32>
    %86 = arith.select %76, %84, %85 : vector<8x384xi1>, vector<8x384xf32>
    %87 = arith.mulf %81, %81 : vector<8x384xf32>
    %cst_36 = arith.constant dense<0.000000e+00> : vector<8xf32>
    %88 = vector.multi_reduction <add>, %87, %cst_36 [1] : vector<8x384xf32> to vector<8xf32>
    %89 = vector.shape_cast %88 : vector<8xf32> to vector<8x1xf32>
    %90 = math.sqrt %89 : vector<8x1xf32>
    %91 = arith.mulf %86, %86 : vector<8x384xf32>
    %cst_37 = arith.constant dense<0.000000e+00> : vector<8xf32>
    %92 = vector.multi_reduction <add>, %91, %cst_37 [1] : vector<8x384xf32> to vector<8xf32>
    %93 = vector.shape_cast %92 : vector<8xf32> to vector<8x1xf32>
    %94 = math.sqrt %93 : vector<8x1xf32>
    %95 = arith.subf %90, %94 : vector<8x1xf32>
    %cst_38 = arith.constant 1.000000e+00 : f32
    %96 = vector.broadcast %cst_38 : f32 to vector<8x1xf32>
    %97 = arith.addf %95, %96 : vector<8x1xf32>
    %cst_39 = arith.constant 0.000000e+00 : f32
    %98 = vector.broadcast %cst_39 : f32 to vector<8x1xf32>
    %99 = arith.maximumf %97, %98 : vector<8x1xf32>
    %cst_40 = arith.constant dense<0.000000e+00> : vector<1xf32>
    %100 = vector.multi_reduction <add>, %99, %cst_40 [0] : vector<8x1xf32> to vector<1xf32>
    %101 = vector.shape_cast %100 : vector<1xf32> to vector<1x1xf32>
    %cst_41 = arith.constant 1.250000e-01 : f32
    %102 = vector.broadcast %cst_41 : f32 to vector<1x1xf32>
    %103 = arith.mulf %101, %102 : vector<1x1xf32>
    %104 = tpu.iota {dimensions = array<i32: 1>} : vector<1x128xi32>
    %c0_i32 = arith.constant 0 : i32
    %105 = vector.broadcast %c0_i32 : i32 to vector<1x128xi32>
    %106 = arith.cmpi eq, %104, %105 : vector<1x128xi32>
    %c1_i32 = arith.constant 1 : i32
    %107 = vector.broadcast %c1_i32 : i32 to vector<1x128xi32>
    %108 = arith.cmpi eq, %104, %107 : vector<1x128xi32>
    %c2_i32 = arith.constant 2 : i32
    %109 = vector.broadcast %c2_i32 : i32 to vector<1x128xi32>
    %110 = arith.cmpi eq, %104, %109 : vector<1x128xi32>
    %cst_42 = arith.constant 0.000000e+00 : f32
    %111 = vector.shape_cast %103 : vector<1x1xf32> to vector<1x1xf32>
    %112 = vector.broadcast %111 : vector<1x1xf32> to vector<1x128xf32>
    %113 = vector.broadcast %cst_42 : f32 to vector<1x128xf32>
    %114 = arith.select %110, %112, %113 : vector<1x128xi1>, vector<1x128xf32>
    %115 = vector.shape_cast %70 : vector<1x1xf32> to vector<1x1xf32>
    %116 = vector.broadcast %115 : vector<1x1xf32> to vector<1x128xf32>
    %117 = arith.select %108, %116, %114 : vector<1x128xi1>, vector<1x128xf32>
    %118 = vector.shape_cast %40 : vector<1x1xf32> to vector<1x1xf32>
    %119 = vector.broadcast %118 : vector<1x1xf32> to vector<1x128xf32>
    %120 = arith.select %106, %119, %117 : vector<1x128xi1>, vector<1x128xf32>
    %c0_43 = arith.constant 0 : index
    %c0_44 = arith.constant 0 : index
    %121 = vector.load %arg8[%c0_43, %c0_44] : memref<1x128xf32, #tpu.memory_space<vmem>>, vector<1x128xf32>
    tpu.vector_store %arg8[%c0_43, %c0_44], %120 {strides = array<i32>} : memref<1x128xf32, #tpu.memory_space<vmem>>, vector<1x128xf32>,
    return
  }
}

</mosaic_0001>

<llo_original>
// kernel: tpu_custom_call.1
$region0: #{tpu_custom_call.1}
  #allocation0 [shape = 'u32[]', space=smem, size = 0x4, offset = 0x4, fixed_abs, tag = 'smem constant byte address 0x4 - core index']
  #allocation1 [shape = 'u32[144,128]{1,0:T(1,128)}', space=vmem, size = 0x12000, scoped, tag = 'internal scratch']
  #allocation2 [shape = 'f32[1]{0:T(128)S(6)}', space=smem, size = 0x200, scoped, tag = 'scoped memory for tpu_custom_call.1']
  %s0 = inlined_call_operand.hbm [shape: f32[24,384], index: 0, kind: input, shape index: {}]
  %s1 = inlined_call_operand.hbm [shape: f32[8,384], index: 1, kind: input, shape index: {}]
  %s2 = inlined_call_operand.hbm [shape: f32[384,512], index: 2, kind: input, shape index: {}]
  %s3 = inlined_call_operand.vmem [shape: f32[1,512], index: 3, kind: input, shape index: {}]
  %s4 = inlined_call_operand.hbm [shape: f32[512,512], index: 4, kind: input, shape index: {}]
  %s5 = inlined_call_operand.vmem [shape: f32[1,512], index: 5, kind: input, shape index: {}]
  %s6 = inlined_call_operand.vmem [shape: f32[1,128], index: 6, kind: input, shape index: {}]
  %s7 = inlined_call_operand.<no memory space> [shape: f32[1], index: 7, kind: input, shape index: {}]
  %s8 = inlined_call_operand.hbm [shape: f32[1,128], index: 8, kind: output, shape index: {}]
  %s9 = sld [smem:[#allocation0]]
  $region58: #{tpu_custom_call.1} parent=0
    _
  %s11 = ssub.s32 1, %s9
  %s12 = scalar_select 0, %s11, %s9
  %13 = sst [smem:[#allocation2]] %s7
  $region1: #{tpu_custom_call.1} parent=0
    #allocation3 [shape = 'u8[36864]{0}', space=vmem, size = 0x9000, scoped, tag = 'input window, operand 0, single buffered']
    #allocation4 [shape = 's32[1]{0}', space=sflag, size = 0x4, scoped, tag = 'scoped memory for tpu_custom_call.1']
    #allocation5 [shape = 's32[1]{0}', space=sflag, size = 0x4, scoped, tag = 'scoped memory for tpu_custom_call.1']
    #allocation6 [shape = 'u8[12288]{0}', space=vmem, size = 0x3000, scoped, tag = 'input window, operand 1, single buffered']
    #allocation7 [shape = 's32[1]{0}', space=sflag, size = 0x4, scoped, tag = 'scoped memory for tpu_custom_call.1']
    #allocation8 [shape = 'u8[786432]{0}', space=vmem, size = 0xc0000, scoped, tag = 'input window, operand 2, single buffered']
    #allocation9 [shape = 'u8[1048576]{0}', space=vmem, size = 0x100000, scoped, tag = 'input window, operand 4, single buffered']
    #allocation10 [shape = 's32[1]{0}', space=sflag, size = 0x4, scoped, tag = 'scoped memory for tpu_custom_call.1']
    #allocation11 [shape = 'u8[512]{0}', space=vmem, size = 0x400, scoped, tag = 'output window, operand 0, single buffered']
    %14 = vsyncpa [#allocation4], 0
    %15 = vsyncpa [#allocation7], 0
    %16 = vsyncpa [#allocation10], 0
    %17 = vsyncpa [#allocation5], 0
    // Predicated region
    $region2: #{tpu_custom_call.1} parent=1 // pred_check
      _
    $region3: #{tpu_custom_call.1} parent=1 // pred_check_branch
      %19 = sbr.rel (0) target = $region5
    $region4: #{tpu_custom_call.1} parent=1 // pred_region
      %s21 = ssub.s32 1152, 1152
      %22 = vsyncadd [#allocation4], %s21
      %s23 = sshll.u32 [#allocation3], 4
      %s24 = int_to_ptr.vmem [resolvable:$true] %s23
      %29 = dma.hbm_to_vmem [thread:$0]  %s0, 1152, %s24, [#allocation4], 384, 384, 24
    $region5: #{tpu_custom_call.1} parent=1 // pred_fallthru
      _
    // Predicated region
    $region6: #{tpu_custom_call.1} parent=1 // pred_check
      _
    $region7: #{tpu_custom_call.1} parent=1 // pred_check_branch
      %31 = sbr.rel (0) target = $region9
    $region8: #{tpu_custom_call.1} parent=1 // pred_region
      %s33 = ssub.s32 384, 384
      %34 = vsyncadd [#allocation7], %s33
      %s36 = sshll.u32 [#allocation6], 4
      %s37 = int_to_ptr.vmem [resolvable:$true] %s36
      %39 = dma.hbm_to_vmem [thread:$0]  %s1, 384, %s37, [#allocation7]
    $region9: #{tpu_custom_call.1} parent=1 // pred_fallthru
      _
    // Predicated region
    $region10: #{tpu_custom_call.1} parent=1 // pred_check
      _
    $region11: #{tpu_custom_call.1} parent=1 // pred_check_branch
      %41 = sbr.rel (0) target = $region13
    $region12: #{tpu_custom_call.1} parent=1 // pred_region
      %s43 = ssub.s32 24576, 24576
      %44 = vsyncadd [#allocation7], %s43
      %s45 = sshll.u32 [#allocation8], 4
      %s46 = int_to_ptr.vmem [resolvable:$true] %s45
      %51 = dma.hbm_to_vmem [thread:$0]  %s2, 24576, %s46, [#allocation7], 512, 512, 32
    $region13: #{tpu_custom_call.1} parent=1 // pred_fallthru
      _
    // Predicated region
    $region14: #{tpu_custom_call.1} parent=1 // pred_check
      _
    $region15: #{tpu_custom_call.1} parent=1 // pred_check_branch
      %53 = sbr.rel (0) target = $region17
    $region16: #{tpu_custom_call.1} parent=1 // pred_region
      _
    $region17: #{tpu_custom_call.1} parent=1 // pred_fallthru
      _
    // Predicated region
    $region18: #{tpu_custom_call.1} parent=1 // pred_check
      _
    $region19: #{tpu_custom_call.1} parent=1 // pred_check_branch
      %55 = sbr.rel (0) target = $region21
    $region20: #{tpu_custom_call.1} parent=1 // pred_region
      %s57 = ssub.s32 32768, 32768
      %58 = vsyncadd [#allocation10], %s57
      %s59 = sshll.u32 [#allocation9], 4
      %s60 = int_to_ptr.vmem [resolvable:$true] %s59
      %65 = dma.hbm_to_vmem [thread:$0]  %s4, 32768, %s60, [#allocation10], 512, 512, 32
    $region21: #{tpu_custom_call.1} parent=1 // pred_fallthru
      _
    // Predicated region
    $region22: #{tpu_custom_call.1} parent=1 // pred_check
      _
    $region23: #{tpu_custom_call.1} parent=1 // pred_check_branch
      %67 = sbr.rel (0) target = $region25
    $region24: #{tpu_custom_call.1} parent=1 // pred_region
      _
    $region25: #{tpu_custom_call.1} parent=1 // pred_fallthru
      _
    // Predicated region
    $region26: #{tpu_custom_call.1} parent=1 // pred_check
      _
    $region27: #{tpu_custom_call.1} parent=1 // pred_check_branch
      %69 = sbr.rel (0) target = $region29
    $region28: #{tpu_custom_call.1} parent=1 // pred_region
      _
    $region29: #{tpu_custom_call.1} parent=1 // pred_fallthru
      _
    // Predicated region
    $region30: #{tpu_custom_call.1} parent=1 // pred_check
      _
    $region31: #{tpu_custom_call.1} parent=1 // pred_check_branch
      %71 = sbr.rel (0) target = $region33
    $region32: #{tpu_custom_call.1} parent=1 // pred_region
      _
    $region33: #{tpu_custom_call.1} parent=1 // pred_fallthru
      _
    // Predicated region
    $region34: #{tpu_custom_call.1} parent=1 // pred_check
      _
    $region35: #{tpu_custom_call.1} parent=1 // pred_check_branch
      %73 = sbr.rel (0) target = $region37
    $region36: #{tpu_custom_call.1} parent=1 // pred_region
      %74 = dma.done [#allocation4], 1152
    $region37: #{tpu_custom_call.1} parent=1 // pred_fallthru
      _
    // Predicated region
    $region38: #{tpu_custom_call.1} parent=1 // pred_check
      _
    $region39: #{tpu_custom_call.1} parent=1 // pred_check_branch
      %76 = sbr.rel (0) target = $region41
    $region40: #{tpu_custom_call.1} parent=1 // pred_region
      %77 = dma.done [#allocation7], 384
    $region41: #{tpu_custom_call.1} parent=1 // pred_fallthru
      _
    // Predicated region
    $region42: #{tpu_custom_call.1} parent=1 // pred_check
      _
    $region43: #{tpu_custom_call.1} parent=1 // pred_check_branch
      %79 = sbr.rel (0) target = $region45
    $region44: #{tpu_custom_call.1} parent=1 // pred_region
      %80 = dma.done [#allocation7], 24576
    $region45: #{tpu_custom_call.1} parent=1 // pred_fallthru
      _
    // Predicated region
    $region46: #{tpu_custom_call.1} parent=1 // pred_check
      _
    $region47: #{tpu_custom_call.1} parent=1 // pred_check_branch
      %82 = sbr.rel (0) target = $region49
    $region48: #{tpu_custom_call.1} parent=1 // pred_region
      %83 = dma.done [#allocation10], 32768
    $region49: #{tpu_custom_call.1} parent=1 // pred_fallthru
      _
    %v84 = vld [vmem:[#allocation3] sm:$0xff]
    %v85 = vld [vmem:[#allocation3 + $0x8] sm:$0xff]
    %v86 = vld [vmem:[#allocation3 + $0x10] sm:$0xff]
    %v87 = vld [vmem:[#allocation3 + $0x18] sm:$0xff]
    %v88 = vld [vmem:[#allocation3 + $0x20] sm:$0xff]
    %v89 = vld [vmem:[#allocation3 + $0x28] sm:$0xff]
    %v90 = vld [vmem:[#allocation3 + $0x30] sm:$0xff]
    %v91 = vld [vmem:[#allocation3 + $0x38] sm:$0xff]
    %v92 = vld [vmem:[#allocation3 + $0x40] sm:$0xff]
    %v93 = vld [vmem:[#allocation6] sm:$0xff]
    %v94 = vld [vmem:[#allocation6 + $0x8] sm:$0xff]
    %v95 = vld [vmem:[#allocation6 + $0x10] sm:$0xff]
    %v96 = vld [vmem:[#allocation8] sm:$0xff]
    %v97 = vld [vmem:[#allocation8 + $0x8] sm:$0xff]
    %v98 = vld [vmem:[#allocation8 + $0x10] sm:$0xff]
    %v99 = vld [vmem:[#allocation8 + $0x18] sm:$0xff]
    %v100 = vld [vmem:[#allocation8 + $0x20] sm:$0xff]
    %v101 = vld [vmem:[#allocation8 + $0x28] sm:$0xff]
    %v102 = vld [vmem:[#allocation8 + $0x30] sm:$0xff]
    %v103 = vld [vmem:[#allocation8 + $0x38] sm:$0xff]
    %v104 = vld [vmem:[#allocation8 + $0x40] sm:$0xff]
    %v105 = vld [vmem:[#allocation8 + $0x48] sm:$0xff]
    %v106 = vld [vmem:[#allocation8 + $0x50] sm:$0xff]
    %v107 = vld [vmem:[#allocation8 + $0x58] sm:$0xff]
    %v108 = vld [vmem:[#allocation8 + $0x60] sm:$0xff]
    %v109 = vld [vmem:[#allocation8 + $0x68] sm:$0xff]
    %v110 = vld [vmem:[#allocation8 + $0x70] sm:$0xff]
    %v111 = vld [vmem:[#allocation8 + $0x78] sm:$0xff]
    %v112 = vld [vmem:[#allocation8 + $0x80] sm:$0xff]
    %v113 = vld [vmem:[#allocation8 + $0x88] sm:$0xff]
    %v114 = vld [vmem:[#allocation8 + $0x90] sm:$0xff]
    %v115 = vld [vmem:[#allocation8 + $0x98] sm:$0xff]
    %v116 = vld [vmem:[#allocation8 + $0xa0] sm:$0xff]
    %v117 = vld [vmem:[#allocation8 + $0xa8] sm:$0xff]
    %v118 = vld [vmem:[#allocation8 + $0xb0] sm:$0xff]
    %v119 = vld [vmem:[#allocation8 + $0xb8] sm:$0xff]
    %v120 = vld [vmem:[#allocation8 + $0xc0] sm:$0xff]
    %v121 = vld [vmem:[#allocation8 + $0xc8] sm:$0xff]
    %v122 = vld [vmem:[#allocation8 + $0xd0] sm:$0xff]
    %v123 = vld [vmem:[#allocation8 + $0xd8] sm:$0xff]
    %v124 = vld [vmem:[#allocation8 + $0xe0] sm:$0xff]
    %v125 = vld [vmem:[#allocation8 + $0xe8] sm:$0xff]
    %v126 = vld [vmem:[#allocation8 + $0xf0] sm:$0xff]
    %v127 = vld [vmem:[#allocation8 + $0xf8] sm:$0xff]
    %v128 = vld [vmem:[#allocation8 + $0x100] sm:$0xff]
    %v129 = vld [vmem:[#allocation8 + $0x108] sm:$0xff]
    %v130 = vld [vmem:[#allocation8 + $0x110] sm:$0xff]
    %v131 = vld [vmem:[#allocation8 + $0x118] sm:$0xff]
    %v132 = vld [vmem:[#allocation8 + $0x120] sm:$0xff]
    %v133 = vld [vmem:[#allocation8 + $0x128] sm:$0xff]
    %v134 = vld [vmem:[#allocation8 + $0x130] sm:$0xff]
    %v135 = vld [vmem:[#allocation8 + $0x138] sm:$0xff]
    %v136 = vld [vmem:[#allocation8 + $0x140] sm:$0xff]
    %v137 = vld [vmem:[#allocation8 + $0x148] sm:$0xff]
    %v138 = vld [vmem:[#allocation8 + $0x150] sm:$0xff]
    %v139 = vld [vmem:[#allocation8 + $0x158] sm:$0xff]
    %v140 = vld [vmem:[#allocation8 + $0x160] sm:$0xff]
    %v141 = vld [vmem:[#allocation8 + $0x168] sm:$0xff]
    %v142 = vld [vmem:[#allocation8 + $0x170] sm:$0xff]
    %v143 = vld [vmem:[#allocation8 + $0x178] sm:$0xff]
    %v144 = vld [vmem:[#allocation8 + $0x180] sm:$0xff]
    %v145 = vld [vmem:[#allocation8 + $0x188] sm:$0xff]
    %v146 = vld [vmem:[#allocation8 + $0x190] sm:$0xff]
    %v147 = vld [vmem:[#allocation8 + $0x198] sm:$0xff]
    %v148 = vld [vmem:[#allocation8 + $0x1a0] sm:$0xff]
    %v149 = vld [vmem:[#allocation8 + $0x1a8] sm:$0xff]
    %v150 = vld [vmem:[#allocation8 + $0x1b0] sm:$0xff]
    %v151 = vld [vmem:[#allocation8 + $0x1b8] sm:$0xff]
    %v152 = vld [vmem:[#allocation8 + $0x1c0] sm:$0xff]
    %v153 = vld [vmem:[#allocation8 + $0x1c8] sm:$0xff]
    %v154 = vld [vmem:[#allocation8 + $0x1d0] sm:$0xff]
    %v155 = vld [vmem:[#allocation8 + $0x1d8] sm:$0xff]
    %v156 = vld [vmem:[#allocation8 + $0x1e0] sm:$0xff]
    %v157 = vld [vmem:[#allocation8 + $0x1e8] sm:$0xff]
    %v158 = vld [vmem:[#allocation8 + $0x1f0] sm:$0xff]
    %v159 = vld [vmem:[#allocation8 + $0x1f8] sm:$0xff]
    %v160 = vld [vmem:[#allocation8 + $0x200] sm:$0xff]
    %v161 = vld [vmem:[#allocation8 + $0x208] sm:$0xff]
    %v162 = vld [vmem:[#allocation8 + $0x210] sm:$0xff]
    %v163 = vld [vmem:[#allocation8 + $0x218] sm:$0xff]
    %v164 = vld [vmem:[#allocation8 + $0x220] sm:$0xff]
    %v165 = vld [vmem:[#allocation8 + $0x228] sm:$0xff]
    %v166 = vld [vmem:[#allocation8 + $0x230] sm:$0xff]
    %v167 = vld [vmem:[#allocation8 + $0x238] sm:$0xff]
    %v168 = vld [vmem:[#allocation8 + $0x240] sm:$0xff]
    %v169 = vld [vmem:[#allocation8 + $0x248] sm:$0xff]
    %v170 = vld [vmem:[#allocation8 + $0x250] sm:$0xff]
    %v171 = vld [vmem:[#allocation8 + $0x258] sm:$0xff]
    %v172 = vld [vmem:[#allocation8 + $0x260] sm:$0xff]
    %v173 = vld [vmem:[#allocation8 + $0x268] sm:$0xff]
    %v174 = vld [vmem:[#allocation8 + $0x270] sm:$0xff]
    %v175 = vld [vmem:[#allocation8 + $0x278] sm:$0xff]
    %v176 = vld [vmem:[#allocation8 + $0x280] sm:$0xff]
    %v177 = vld [vmem:[#allocation8 + $0x288] sm:$0xff]
    %v178 = vld [vmem:[#allocation8 + $0x290] sm:$0xff]
    %v179 = vld [vmem:[#allocation8 + $0x298] sm:$0xff]
    %v180 = vld [vmem:[#allocation8 + $0x2a0] sm:$0xff]
    %v181 = vld [vmem:[#allocation8 + $0x2a8] sm:$0xff]
    %v182 = vld [vmem:[#allocation8 + $0x2b0] sm:$0xff]
    %v183 = vld [vmem:[#allocation8 + $0x2b8] sm:$0xff]
    %v184 = vld [vmem:[#allocation8 + $0x2c0] sm:$0xff]
    %v185 = vld [vmem:[#allocation8 + $0x2c8] sm:$0xff]
    %v186 = vld [vmem:[#allocation8 + $0x2d0] sm:$0xff]
    %v187 = vld [vmem:[#allocation8 + $0x2d8] sm:$0xff]
    %v188 = vld [vmem:[#allocation8 + $0x2e0] sm:$0xff]
    %v189 = vld [vmem:[#allocation8 + $0x2e8] sm:$0xff]
    %v190 = vld [vmem:[#allocation8 + $0x2f0] sm:$0xff]
    %v191 = vld [vmem:[#allocation8 + $0x2f8] sm:$0xff]
    %v192 = vld [vmem:[#allocation8 + $0x300] sm:$0xff]
    %v193 = vld [vmem:[#allocation8 + $0x308] sm:$0xff]
    %v194 = vld [vmem:[#allocation8 + $0x310] sm:$0xff]
    %v195 = vld [vmem:[#allocation8 + $0x318] sm:$0xff]
    %v196 = vld [vmem:[#allocation8 + $0x320] sm:$0xff]
    %v197 = vld [vmem:[#allocation8 + $0x328] sm:$0xff]
    %v198 = vld [vmem:[#allocation8 + $0x330] sm:$0xff]
    %v199 = vld [vmem:[#allocation8 + $0x338] sm:$0xff]
    %v200 = vld [vmem:[#allocation8 + $0x340] sm:$0xff]
    %v201 = vld [vmem:[#allocation8 + $0x348] sm:$0xff]
    %v202 = vld [vmem:[#allocation8 + $0x350] sm:$0xff]
    %v203 = vld [vmem:[#allocation8 + $0x358] sm:$0xff]
    %v204 = vld [vmem:[#allocation8 + $0x360] sm:$0xff]
    %v205 = vld [vmem:[#allocation8 + $0x368] sm:$0xff]
    %v206 = vld [vmem:[#allocation8 + $0x370] sm:$0xff]
    %v207 = vld [vmem:[#allocation8 + $0x378] sm:$0xff]
    %v208 = vld [vmem:[#allocation8 + $0x380] sm:$0xff]
    %v209 = vld [vmem:[#allocation8 + $0x388] sm:$0xff]
    %v210 = vld [vmem:[#allocation8 + $0x390] sm:$0xff]
    %v211 = vld [vmem:[#allocation8 + $0x398] sm:$0xff]
    %v212 = vld [vmem:[#allocation8 + $0x3a0] sm:$0xff]
    %v213 = vld [vmem:[#allocation8 + $0x3a8] sm:$0xff]
    %v214 = vld [vmem:[#allocation8 + $0x3b0] sm:$0xff]
    %v215 = vld [vmem:[#allocation8 + $0x3b8] sm:$0xff]
    %v216 = vld [vmem:[#allocation8 + $0x3c0] sm:$0xff]
    %v217 = vld [vmem:[#allocation8 + $0x3c8] sm:$0xff]
    %v218 = vld [vmem:[#allocation8 + $0x3d0] sm:$0xff]
    %v219 = vld [vmem:[#allocation8 + $0x3d8] sm:$0xff]
    %v220 = vld [vmem:[#allocation8 + $0x3e0] sm:$0xff]
    %v221 = vld [vmem:[#allocation8 + $0x3e8] sm:$0xff]
    %v222 = vld [vmem:[#allocation8 + $0x3f0] sm:$0xff]
    %v223 = vld [vmem:[#allocation8 + $0x3f8] sm:$0xff]
    %v224 = vld [vmem:[#allocation8 + $0x400] sm:$0xff]
    %v225 = vld [vmem:[#allocation8 + $0x408] sm:$0xff]
    %v226 = vld [vmem:[#allocation8 + $0x410] sm:$0xff]
    %v227 = vld [vmem:[#allocation8 + $0x418] sm:$0xff]
    %v228 = vld [vmem:[#allocation8 + $0x420] sm:$0xff]
    %v229 = vld [vmem:[#allocation8 + $0x428] sm:$0xff]
    %v230 = vld [vmem:[#allocation8 + $0x430] sm:$0xff]
    %v231 = vld [vmem:[#allocation8 + $0x438] sm:$0xff]
    %v232 = vld [vmem:[#allocation8 + $0x440] sm:$0xff]
    %v233 = vld [vmem:[#allocation8 + $0x448] sm:$0xff]
    %v234 = vld [vmem:[#allocation8 + $0x450] sm:$0xff]
    %v235 = vld [vmem:[#allocation8 + $0x458] sm:$0xff]
    %v236 = vld [vmem:[#allocation8 + $0x460] sm:$0xff]
    %v237 = vld [vmem:[#allocation8 + $0x468] sm:$0xff]
    %v238 = vld [vmem:[#allocation8 + $0x470] sm:$0xff]
    %v239 = vld [vmem:[#allocation8 + $0x478] sm:$0xff]
    %v240 = vld [vmem:[#allocation8 + $0x480] sm:$0xff]
    %v241 = vld [vmem:[#allocation8 + $0x488] sm:$0xff]
    %v242 = vld [vmem:[#allocation8 + $0x490] sm:$0xff]
    %v243 = vld [vmem:[#allocation8 + $0x498] sm:$0xff]
    %v244 = vld [vmem:[#allocation8 + $0x4a0] sm:$0xff]
    %v245 = vld [vmem:[#allocation8 + $0x4a8] sm:$0xff]
    %v246 = vld [vmem:[#allocation8 + $0x4b0] sm:$0xff]
    %v247 = vld [vmem:[#allocation8 + $0x4b8] sm:$0xff]
    %v248 = vld [vmem:[#allocation8 + $0x4c0] sm:$0xff]
    %v249 = vld [vmem:[#allocation8 + $0x4c8] sm:$0xff]
    %v250 = vld [vmem:[#allocation8 + $0x4d0] sm:$0xff]
    %v251 = vld [vmem:[#allocation8 + $0x4d8] sm:$0xff]
    %v252 = vld [vmem:[#allocation8 + $0x4e0] sm:$0xff]
    %v253 = vld [vmem:[#allocation8 + $0x4e8] sm:$0xff]
    %v254 = vld [vmem:[#allocation8 + $0x4f0] sm:$0xff]
    %v255 = vld [vmem:[#allocation8 + $0x4f8] sm:$0xff]
    %v256 = vld [vmem:[#allocation8 + $0x500] sm:$0xff]
    %v257 = vld [vmem:[#allocation8 + $0x508] sm:$0xff]
    %v258 = vld [vmem:[#allocation8 + $0x510] sm:$0xff]
    %v259 = vld [vmem:[#allocation8 + $0x518] sm:$0xff]
    %v260 = vld [vmem:[#allocation8 + $0x520] sm:$0xff]
    %v261 = vld [vmem:[#allocation8 + $0x528] sm:$0xff]
    %v262 = vld [vmem:[#allocation8 + $0x530] sm:$0xff]
    %v263 = vld [vmem:[#allocation8 + $0x538] sm:$0xff]
    %v264 = vld [vmem:[#allocation8 + $0x540] sm:$0xff]
    %v265 = vld [vmem:[#allocation8 + $0x548] sm:$0xff]
    %v266 = vld [vmem:[#allocation8 + $0x550] sm:$0xff]
    %v267 = vld [vmem:[#allocation8 + $0x558] sm:$0xff]
    %v268 = vld [vmem:[#allocation8 + $0x560] sm:$0xff]
    %v269 = vld [vmem:[#allocation8 + $0x568] sm:$0xff]
    %v270 = vld [vmem:[#allocation8 + $0x570] sm:$0xff]
    %v271 = vld [vmem:[#allocation8 + $0x578] sm:$0xff]
    %v272 = vld [vmem:[#allocation8 + $0x580] sm:$0xff]
    %v273 = vld [vmem:[#allocation8 + $0x588] sm:$0xff]
    %v274 = vld [vmem:[#allocation8 + $0x590] sm:$0xff]
    %v275 = vld [vmem:[#allocation8 + $0x598] sm:$0xff]
    %v276 = vld [vmem:[#allocation8 + $0x5a0] sm:$0xff]
    %v277 = vld [vmem:[#allocation8 + $0x5a8] sm:$0xff]
    %v278 = vld [vmem:[#allocation8 + $0x5b0] sm:$0xff]
    %v279 = vld [vmem:[#allocation8 + $0x5b8] sm:$0xff]
    %v280 = vld [vmem:[#allocation8 + $0x5c0] sm:$0xff]
    %v281 = vld [vmem:[#allocation8 + $0x5c8] sm:$0xff]
    %v282 = vld [vmem:[#allocation8 + $0x5d0] sm:$0xff]
    %v283 = vld [vmem:[#allocation8 + $0x5d8] sm:$0xff]
    %v284 = vld [vmem:[#allocation8 + $0x5e0] sm:$0xff]
    %v285 = vld [vmem:[#allocation8 + $0x5e8] sm:$0xff]
    %v286 = vld [vmem:[#allocation8 + $0x5f0] sm:$0xff]
    %v287 = vld [vmem:[#allocation8 + $0x5f8] sm:$0xff]
    %v288 = vld [vmem:[%s3] sm:$0xf]
    %v290 = vlaneseq
    %v291 = vshrl.u32 %v290, 7
    %v292 = vsub.s32 0, %v291
    %v293 = vrot.slane %v288, %v292
    %v294 = vlaneseq
    %v295 = vshrl.u32 %v294, 7
    %v296 = vsub.s32 1, %v295
    %v297 = vrot.slane %v288, %v296
    %v298 = vlaneseq
    %v299 = vshrl.u32 %v298, 7
    %v300 = vsub.s32 2, %v299
    %v301 = vrot.slane %v288, %v300
    %v302 = vlaneseq
    %v303 = vshrl.u32 %v302, 7
    %v304 = vsub.s32 3, %v303
    %v305 = vrot.slane %v288, %v304
    %310 = vmatprep.subr.mxu0 %v97
    %311 = vmatpush1.msra.mxu0 %v96
    %312 = vmatprep.subr.mxu0 %v101
    %313 = vmatpush1.msra.mxu0 %v100
    %314 = vmatprep.subr.mxu0 %v105
    %315 = vmatpush1.msra.mxu0 %v104
    %316 = vmatprep.subr.mxu0 %v109
    %317 = vmatpush1.msra.mxu0 %v108
    %318 = vmatprep.subr.mxu0 %v113
    %319 = vmatpush1.msra.mxu0 %v112
    %320 = vmatprep.subr.mxu0 %v117
    %321 = vmatpush1.msra.mxu0 %v116
    %322 = vmatprep.subr.mxu0 %v121
    %323 = vmatpush1.msra.mxu0 %v120
    %324 = vmatprep.subr.mxu0 %v125
    %325 = vmatpush1.msra.mxu0 %v124
    %326 = vmatprep.subr.mxu0 %v129
    %327 = vmatpush1.msra.mxu0 %v128
    %328 = vmatprep.subr.mxu0 %v133
    %329 = vmatpush1.msra.mxu0 %v132
    %330 = vmatprep.subr.mxu0 %v137
    %331 = vmatpush1.msra.mxu0 %v136
    %332 = vmatprep.subr.mxu0 %v141
    %333 = vmatpush1.msra.mxu0 %v140
    %334 = vmatprep.subr.mxu0 %v145
    %335 = vmatpush1.msra.mxu0 %v144
    %336 = vmatprep.subr.mxu0 %v149
    %337 = vmatpush1.msra.mxu0 %v148
    %338 = vmatprep.subr.mxu0 %v153
    %339 = vmatpush1.msra.mxu0 %v152
    %340 = vmatprep.subr.mxu0 %v157
    %341 = vmatpush1.msra.mxu0 %v156
    %342 = vmatprep.subr.mxu0 %v161
    %343 = vmatpush1.msra.mxu0 %v160
    %344 = vmatprep.subr.mxu0 %v165
    %345 = vmatpush1.msra.mxu0 %v164
    %346 = vmatprep.subr.mxu0 %v169
    %347 = vmatpush1.msra.mxu0 %v168
    %348 = vmatprep.subr.mxu0 %v173
    %349 = vmatpush1.msra.mxu0 %v172
    %350 = vmatprep.subr.mxu0 %v177
    %351 = vmatpush1.msra.mxu0 %v176
    %352 = vmatprep.subr.mxu0 %v181
    %353 = vmatpush1.msra.mxu0 %v180
    %354 = vmatprep.subr.mxu0 %v185
    %355 = vmatpush1.msra.mxu0 %v184
    %356 = vmatprep.subr.mxu0 %v189
    %357 = vmatpush1.msra.mxu0 %v188
    %358 = vmatprep.subr.mxu0 %v193
    %359 = vmatpush1.msra.mxu0 %v192
    %360 = vmatprep.subr.mxu0 %v197
    %361 = vmatpush1.msra.mxu0 %v196
    %362 = vmatprep.subr.mxu0 %v201
    %363 = vmatpush1.msra.mxu0 %v200
    %364 = vmatprep.subr.mxu0 %v205
    %365 = vmatpush1.msra.mxu0 %v204
    %366 = vmatprep.subr.mxu0 %v209
    %367 = vmatpush1.msra.mxu0 %v208
    %368 = vmatprep.subr.mxu0 %v213
    %369 = vmatpush1.msra.mxu0 %v212
    %370 = vmatprep.subr.mxu0 %v217
    %371 = vmatpush1.msra.mxu0 %v216
    %372 = vmatprep.subr.mxu0 %v221
    %373 = vmatpush1.msra.mxu0 %v220
    %374 = vmatprep.mubr.f32.mxu0 %v85
    %375 = vmatmul.mubr.f32.gmra.mrb[0].mxu0 %v84
    %v376 = vpop.f32.mrb[0].mxu0
    %v377 = vadd.f32 %v293, %v376
    %v378 = vpop.f32.mrb[0].mxu0
    %v379 = vadd.f32 %v297, %v378
    %380 = vmatprep.mubr.f32.mxu0 %v88
    %381 = vmatmul.mubr.f32.gmra.mrb[0].mxu0 %v87
    %v382 = vpop.f32.mrb[0].mxu0
    %v383 = vadd.f32 %v293, %v382
    %v384 = vpop.f32.mrb[0].mxu0
    %v385 = vadd.f32 %v297, %v384
    %386 = vmatprep.mubr.f32.mxu0 %v91
    %387 = vmatmul.mubr.f32.gmra.mrb[0].mxu0 %v90
    %v388 = vpop.f32.mrb[0].mxu0
    %v389 = vadd.f32 %v293, %v388
    %v390 = vpop.f32.mrb[0].mxu0
    %v391 = vadd.f32 %v297, %v390
    %392 = vdwg.mxu0
    %393 = vmatprep.subr.mxu0 %v225
    %394 = vmatpush1.msra.mxu0 %v224
    %395 = vmatprep.subr.mxu0 %v229
    %396 = vmatpush1.msra.mxu0 %v228
    %397 = vmatprep.subr.mxu0 %v233
    %398 = vmatpush1.msra.mxu0 %v232
    %399 = vmatprep.subr.mxu0 %v237
    %400 = vmatpush1.msra.mxu0 %v236
    %401 = vmatprep.subr.mxu0 %v241
    %402 = vmatpush1.msra.mxu0 %v240
    %403 = vmatprep.subr.mxu0 %v245
    %404 = vmatpush1.msra.mxu0 %v244
    %405 = vmatprep.subr.mxu0 %v249
    %406 = vmatpush1.msra.mxu0 %v248
    %407 = vmatprep.subr.mxu0 %v253
    %408 = vmatpush1.msra.mxu0 %v252
    %409 = vmatprep.subr.mxu0 %v257
    %410 = vmatpush1.msra.mxu0 %v256
    %411 = vmatprep.subr.mxu0 %v261
    %412 = vmatpush1.msra.mxu0 %v260
    %413 = vmatprep.subr.mxu0 %v265
    %414 = vmatpush1.msra.mxu0 %v264
    %415 = vmatprep.subr.mxu0 %v269
    %416 = vmatpush1.msra.mxu0 %v268
    %417 = vmatprep.subr.mxu0 %v273
    %418 = vmatpush1.msra.mxu0 %v272
    %419 = vmatprep.subr.mxu0 %v277
    %420 = vmatpush1.msra.mxu0 %v276
    %421 = vmatprep.subr.mxu0 %v281
    %422 = vmatpush1.msra.mxu0 %v280
    %423 = vmatprep.subr.mxu0 %v285
    %424 = vmatpush1.msra.mxu0 %v284
    %425 = vmatprep.subr.mxu0 0.0
    %426 = vmatpush1.msra.mxu0 0.0
    %427 = vmatprep.subr.mxu0 0.0
    %428 = vmatpush1.msra.mxu0 0.0
    %429 = vmatprep.subr.mxu0 0.0
    %430 = vmatpush1.msra.mxu0 0.0
    %431 = vmatprep.subr.mxu0 0.0
    %432 = vmatpush1.msra.mxu0 0.0
    %433 = vmatprep.subr.mxu0 0.0
    %434 = vmatpush1.msra.mxu0 0.0
    %435 = vmatprep.subr.mxu0 0.0
    %436 = vmatpush1.msra.mxu0 0.0
    %437 = vmatprep.subr.mxu0 0.0
    %438 = vmatpush1.msra.mxu0 0.0
    %439 = vmatprep.subr.mxu0 0.0
    %440 = vmatpush1.msra.mxu0 0.0
    %441 = vmatprep.subr.mxu0 0.0
    %442 = vmatpush1.msra.mxu0 0.0
    %443 = vmatprep.subr.mxu0 0.0
    %444 = vmatpush1.msra.mxu0 0.0
    %445 = vmatprep.subr.mxu0 0.0
    %446 = vmatpush1.msra.mxu0 0.0
    %447 = vmatprep.subr.mxu0 0.0
    %448 = vmatpush1.msra.mxu0 0.0
    %449 = vmatprep.subr.mxu0 0.0
    %450 = vmatpush1.msra.mxu0 0.0
    %451 = vmatprep.subr.mxu0 0.0
    %452 = vmatpush1.msra.mxu0 0.0
    %453 = vmatprep.subr.mxu0 0.0
    %454 = vmatpush1.msra.mxu0 0.0
    %455 = vmatprep.subr.mxu0 0.0
    %456 = vmatpush1.msra.mxu0 0.0
    %457 = vmatprep.mubr.f32.mxu0 0.0
    %458 = vmatmul.mubr.f32.gmra.mrb[0].mxu0 %v86
    %v459 = vpop.f32.mrb[0].mxu0
    %v460 = vadd.f32 %v377, %v459
    %v461 = vpop.f32.mrb[0].mxu0
    %v462 = vadd.f32 %v379, %v461
    %463 = vmatprep.mubr.f32.mxu0 0.0
    %464 = vmatmul.mubr.f32.gmra.mrb[0].mxu0 %v89
    %v465 = vpop.f32.mrb[0].mxu0
    %v466 = vadd.f32 %v383, %v465
    %v467 = vpop.f32.mrb[0].mxu0
    %v468 = vadd.f32 %v385, %v467
    %469 = vmatprep.mubr.f32.mxu0 0.0
    %470 = vmatmul.mubr.f32.gmra.mrb[0].mxu0 %v92
    %v471 = vpop.f32.mrb[0].mxu0
    %v472 = vadd.f32 %v389, %v471
    %v473 = vpop.f32.mrb[0].mxu0
    %v474 = vadd.f32 %v391, %v473
    %475 = vdwg.mxu0
    %476 = vmatprep.subr.mxu0 %v99
    %477 = vmatpush1.msra.mxu0 %v98
    %478 = vmatprep.subr.mxu0 %v103
    %479 = vmatpush1.msra.mxu0 %v102
    %480 = vmatprep.subr.mxu0 %v107
    %481 = vmatpush1.msra.mxu0 %v106
    %482 = vmatprep.subr.mxu0 %v111
    %483 = vmatpush1.msra.mxu0 %v110
    %484 = vmatprep.subr.mxu0 %v115
    %485 = vmatpush1.msra.mxu0 %v114
    %486 = vmatprep.subr.mxu0 %v119
    %487 = vmatpush1.msra.mxu0 %v118
    %488 = vmatprep.subr.mxu0 %v123
    %489 = vmatpush1.msra.mxu0 %v122
    %490 = vmatprep.subr.mxu0 %v127
    %491 = vmatpush1.msra.mxu0 %v126
    %492 = vmatprep.subr.mxu0 %v131
    %493 = vmatpush1.msra.mxu0 %v130
    %494 = vmatprep.subr.mxu0 %v135
    %495 = vmatpush1.msra.mxu0 %v134
    %496 = vmatprep.subr.mxu0 %v139
    %497 = vmatpush1.msra.mxu0 %v138
    %498 = vmatprep.subr.mxu0 %v143
    %499 = vmatpush1.msra.mxu0 %v142
    %500 = vmatprep.subr.mxu0 %v147
    %501 = vmatpush1.msra.mxu0 %v146
    %502 = vmatprep.subr.mxu0 %v151
    %503 = vmatpush1.msra.mxu0 %v150
    %504 = vmatprep.subr.mxu0 %v155
    %505 = vmatpush1.msra.mxu0 %v154
    %506 = vmatprep.subr.mxu0 %v159
    %507 = vmatpush1.msra.mxu0 %v158
    %508 = vmatprep.subr.mxu0 %v163
    %509 = vmatpush1.msra.mxu0 %v162
    %510 = vmatprep.subr.mxu0 %v167
    %511 = vmatpush1.msra.mxu0 %v166
    %512 = vmatprep.subr.mxu0 %v171
    %513 = vmatpush1.msra.mxu0 %v170
    %514 = vmatprep.subr.mxu0 %v175
    %515 = vmatpush1.msra.mxu0 %v174
    %516 = vmatprep.subr.mxu0 %v179
    %517 = vmatpush1.msra.mxu0 %v178
    %518 = vmatprep.subr.mxu0 %v183
    %519 = vmatpush1.msra.mxu0 %v182
    %520 = vmatprep.subr.mxu0 %v187
    %521 = vmatpush1.msra.mxu0 %v186
    %522 = vmatprep.subr.mxu0 %v191
    %523 = vmatpush1.msra.mxu0 %v190
    %524 = vmatprep.subr.mxu0 %v195
    %525 = vmatpush1.msra.mxu0 %v194
    %526 = vmatprep.subr.mxu0 %v199
    %527 = vmatpush1.msra.mxu0 %v198
    %528 = vmatprep.subr.mxu0 %v203
    %529 = vmatpush1.msra.mxu0 %v202
    %530 = vmatprep.subr.mxu0 %v207
    %531 = vmatpush1.msra.mxu0 %v206
    %532 = vmatprep.subr.mxu0 %v211
    %533 = vmatpush1.msra.mxu0 %v210
    %534 = vmatprep.subr.mxu0 %v215
    %535 = vmatpush1.msra.mxu0 %v214
    %536 = vmatprep.subr.mxu0 %v219
    %537 = vmatpush1.msra.mxu0 %v218
    %538 = vmatprep.subr.mxu0 %v223
    %539 = vmatpush1.msra.mxu0 %v222
    %540 = vmatprep.mubr.f32.mxu0 %v85
    %541 = vmatmul.mubr.f32.gmra.mrb[0].mxu0 %v84
    %v542 = vpop.f32.mrb[0].mxu0
    %v543 = vadd.f32 %v301, %v542
    %v544 = vpop.f32.mrb[0].mxu0
    %v545 = vadd.f32 %v305, %v544
    %546 = vmatprep.mubr.f32.mxu0 %v88
    %547 = vmatmul.mubr.f32.gmra.mrb[0].mxu0 %v87
    %v548 = vpop.f32.mrb[0].mxu0
    %v549 = vadd.f32 %v301, %v548
    %v550 = vpop.f32.mrb[0].mxu0
    %v551 = vadd.f32 %v305, %v550
    %552 = vmatprep.mubr.f32.mxu0 %v91
    %553 = vmatmul.mubr.f32.gmra.mrb[0].mxu0 %v90
    %v554 = vpop.f32.mrb[0].mxu0
    %v555 = vadd.f32 %v301, %v554
    %v556 = vpop.f32.mrb[0].mxu0
    %v557 = vadd.f32 %v305, %v556
    %558 = vdwg.mxu0
    %559 = vmatprep.subr.mxu0 %v227
    %560 = vmatpush1.msra.mxu0 %v226
    %561 = vmatprep.subr.mxu0 %v231
    %562 = vmatpush1.msra.mxu0 %v230
    %563 = vmatprep.subr.mxu0 %v235
    %564 = vmatpush1.msra.mxu0 %v234
    %565 = vmatprep.subr.mxu0 %v239
    %566 = vmatpush1.msra.mxu0 %v238
    %567 = vmatprep.subr.mxu0 %v243
    %568 = vmatpush1.msra.mxu0 %v242
    %569 = vmatprep.subr.mxu0 %v247
    %570 = vmatpush1.msra.mxu0 %v246
    %571 = vmatprep.subr.mxu0 %v251
    %572 = vmatpush1.msra.mxu0 %v250
    %573 = vmatprep.subr.mxu0 %v255
    %574 = vmatpush1.msra.mxu0 %v254
    %575 = vmatprep.subr.mxu0 %v259
    %576 = vmatpush1.msra.mxu0 %v258
    %577 = vmatprep.subr.mxu0 %v263
    %578 = vmatpush1.msra.mxu0 %v262
    %579 = vmatprep.subr.mxu0 %v267
    %580 = vmatpush1.msra.mxu0 %v266
    %581 = vmatprep.subr.mxu0 %v271
    %582 = vmatpush1.msra.mxu0 %v270
    %583 = vmatprep.subr.mxu0 %v275
    %584 = vmatpush1.msra.mxu0 %v274
    %585 = vmatprep.subr.mxu0 %v279
    %586 = vmatpush1.msra.mxu0 %v278
    %587 = vmatprep.subr.mxu0 %v283
    %588 = vmatpush1.msra.mxu0 %v282
    %589 = vmatprep.subr.mxu0 %v287
    %590 = vmatpush1.msra.mxu0 %v286
    %591 = vmatprep.subr.mxu0 0.0
    %592 = vmatpush1.msra.mxu0 0.0
    %593 = vmatprep.subr.mxu0 0.0
    %594 = vmatpush1.msra.mxu0 0.0
    %595 = vmatprep.subr.mxu0 0.0
    %596 = vmatpush1.msra.mxu0 0.0
    %597 = vmatprep.subr.mxu0 0.0
    %598 = vmatpush1.msra.mxu0 0.0
    %599 = vmatprep.subr.mxu0 0.0
    %600 = vmatpush1.msra.mxu0 0.0
    %601 = vmatprep.subr.mxu0 0.0
    %602 = vmatpush1.msra.mxu0 0.0
    %603 = vmatprep.subr.mxu0 0.0
    %604 = vmatpush1.msra.mxu0 0.0
    %605 = vmatprep.subr.mxu0 0.0
    %606 = vmatpush1.msra.mxu0 0.0
    %607 = vmatprep.subr.mxu0 0.0
    %608 = vmatpush1.msra.mxu0 0.0
    %609 = vmatprep.subr.mxu0 0.0
    %610 = vmatpush1.msra.mxu0 0.0
    %611 = vmatprep.subr.mxu0 0.0
    %612 = vmatpush1.msra.mxu0 0.0
    %613 = vmatprep.subr.mxu0 0.0
    %614 = vmatpush1.msra.mxu0 0.0
    %615 = vmatprep.subr.mxu0 0.0
    %616 = vmatpush1.msra.mxu0 0.0
    %617 = vmatprep.subr.mxu0 0.0
    %618 = vmatpush1.msra.mxu0 0.0
    %619 = vmatprep.subr.mxu0 0.0
    %620 = vmatpush1.msra.mxu0 0.0
    %621 = vmatprep.subr.mxu0 0.0
    %622 = vmatpush1.msra.mxu0 0.0
    %623 = vmatprep.mubr.f32.mxu0 0.0
    %624 = vmatmul.mubr.f32.gmra.mrb[0].mxu0 %v86
    %v625 = vpop.f32.mrb[0].mxu0
    %v626 = vadd.f32 %v543, %v625
    %v627 = vpop.f32.mrb[0].mxu0
    %v628 = vadd.f32 %v545, %v627
    %629 = vmatprep.mubr.f32.mxu0 0.0
    %630 = vmatmul.mubr.f32.gmra.mrb[0].mxu0 %v89
    %v631 = vpop.f32.mrb[0].mxu0
    %v632 = vadd.f32 %v549, %v631
    %v633 = vpop.f32.mrb[0].mxu0
    %v634 = vadd.f32 %v551, %v633
    %635 = vmatprep.mubr.f32.mxu0 0.0
    %636 = vmatmul.mubr.f32.gmra.mrb[0].mxu0 %v92
    %v637 = vpop.f32.mrb[0].mxu0
    %v638 = vadd.f32 %v555, %v637
    %v639 = vpop.f32.mrb[0].mxu0
    %v640 = vadd.f32 %v557, %v639
    %641 = vdwg.mxu0
    %v642 = vmax.f32 %v460, 0.0
    %v643 = vmax.f32 %v462, 0.0
    %v644 = vmax.f32 %v626, 0.0
    %v645 = vmax.f32 %v628, 0.0
    %v646 = vmax.f32 %v466, 0.0
    %v647 = vmax.f32 %v468, 0.0
    %v648 = vmax.f32 %v632, 0.0
    %v649 = vmax.f32 %v634, 0.0
    %v650 = vmax.f32 %v472, 0.0
    %v651 = vmax.f32 %v474, 0.0
    %v652 = vmax.f32 %v638, 0.0
    %v653 = vmax.f32 %v640, 0.0
    %v654 = vld [vmem:[#allocation9] sm:$0xff]
    %v655 = vld [vmem:[#allocation9 + $0x8] sm:$0xff]
    %v656 = vld [vmem:[#allocation9 + $0x10] sm:$0xff]
    %v657 = vld [vmem:[#allocation9 + $0x18] sm:$0xff]
    %v658 = vld [vmem:[#allocation9 + $0x20] sm:$0xff]
    %v659 = vld [vmem:[#allocation9 + $0x28] sm:$0xff]
    %v660 = vld [vmem:[#allocation9 + $0x30] sm:$0xff]
    %v661 = vld [vmem:[#allocation9 + $0x38] sm:$0xff]
    %v662 = vld [vmem:[#allocation9 + $0x40] sm:$0xff]
    %v663 = vld [vmem:[#allocation9 + $0x48] sm:$0xff]
    %v664 = vld [vmem:[#allocation9 + $0x50] sm:$0xff]
    %v665 = vld [vmem:[#allocation9 + $0x58] sm:$0xff]
    %v666 = vld [vmem:[#allocation9 + $0x60] sm:$0xff]
    %v667 = vld [vmem:[#allocation9 + $0x68] sm:$0xff]
    %v668 = vld [vmem:[#allocation9 + $0x70] sm:$0xff]
    %v669 = vld [vmem:[#allocation9 + $0x78] sm:$0xff]
    %v670 = vld [vmem:[#allocation9 + $0x80] sm:$0xff]
    %v671 = vld [vmem:[#allocation9 + $0x88] sm:$0xff]
    %v672 = vld [vmem:[#allocation9 + $0x90] sm:$0xff]
    %v673 = vld [vmem:[#allocation9 + $0x98] sm:$0xff]
    %v674 = vld [vmem:[#allocation9 + $0xa0] sm:$0xff]
    %v675 = vld [vmem:[#allocation9 + $0xa8] sm:$0xff]
    %v676 = vld [vmem:[#allocation9 + $0xb0] sm:$0xff]
    %v677 = vld [vmem:[#allocation9 + $0xb8] sm:$0xff]
    %v678 = vld [vmem:[#allocation9 + $0xc0] sm:$0xff]
    %v679 = vld [vmem:[#allocation9 + $0xc8] sm:$0xff]
    %v680 = vld [vmem:[#allocation9 + $0xd0] sm:$0xff]
    %v681 = vld [vmem:[#allocation9 + $0xd8] sm:$0xff]
    %v682 = vld [vmem:[#allocation9 + $0xe0] sm:$0xff]
    %v683 = vld [vmem:[#allocation9 + $0xe8] sm:$0xff]
    %v684 = vld [vmem:[#allocation9 + $0xf0] sm:$0xff]
    %v685 = vld [vmem:[#allocation9 + $0xf8] sm:$0xff]
    %v686 = vld [vmem:[#allocation9 + $0x100] sm:$0xff]
    %v687 = vld [vmem:[#allocation9 + $0x108] sm:$0xff]
    %v688 = vld [vmem:[#allocation9 + $0x110] sm:$0xff]
    %v689 = vld [vmem:[#allocation9 + $0x118] sm:$0xff]
    %v690 = vld [vmem:[#allocation9 + $0x120] sm:$0xff]
    %v691 = vld [vmem:[#allocation9 + $0x128] sm:$0xff]
    %v692 = vld [vmem:[#allocation9 + $0x130] sm:$0xff]
    %v693 = vld [vmem:[#allocation9 + $0x138] sm:$0xff]
    %v694 = vld [vmem:[#allocation9 + $0x140] sm:$0xff]
    %v695 = vld [vmem:[#allocation9 + $0x148] sm:$0xff]
    %v696 = vld [vmem:[#allocation9 + $0x150] sm:$0xff]
    %v697 = vld [vmem:[#allocation9 + $0x158] sm:$0xff]
    %v698 = vld [vmem:[#allocation9 + $0x160] sm:$0xff]
    %v699 = vld [vmem:[#allocation9 + $0x168] sm:$0xff]
    %v700 = vld [vmem:[#allocation9 + $0x170] sm:$0xff]
    %v701 = vld [vmem:[#allocation9 + $0x178] sm:$0xff]
    %v702 = vld [vmem:[#allocation9 + $0x180] sm:$0xff]
    %v703 = vld [vmem:[#allocation9 + $0x188] sm:$0xff]
    %v704 = vld [vmem:[#allocation9 + $0x190] sm:$0xff]
    %v705 = vld [vmem:[#allocation9 + $0x198] sm:$0xff]
    %v706 = vld [vmem:[#allocation9 + $0x1a0] sm:$0xff]
    %v707 = vld [vmem:[#allocation9 + $0x1a8] sm:$0xff]
    %v708 = vld [vmem:[#allocation9 + $0x1b0] sm:$0xff]
    %v709 = vld [vmem:[#allocation9 + $0x1b8] sm:$0xff]
    %v710 = vld [vmem:[#allocation9 + $0x1c0] sm:$0xff]
    %v711 = vld [vmem:[#allocation9 + $0x1c8] sm:$0xff]
    %v712 = vld [vmem:[#allocation9 + $0x1d0] sm:$0xff]
    %v713 = vld [vmem:[#allocation9 + $0x1d8] sm:$0xff]
    %v714 = vld [vmem:[#allocation9 + $0x1e0] sm:$0xff]
    %v715 = vld [vmem:[#allocation9 + $0x1e8] sm:$0xff]
    %v716 = vld [vmem:[#allocation9 + $0x1f0] sm:$0xff]
    %v717 = vld [vmem:[#allocation9 + $0x1f8] sm:$0xff]
    %v718 = vld [vmem:[#allocation9 + $0x200] sm:$0xff]
    %v719 = vld [vmem:[#allocation9 + $0x208] sm:$0xff]
    %v720 = vld [vmem:[#allocation9 + $0x210] sm:$0xff]
    %v721 = vld [vmem:[#allocation9 + $0x218] sm:$0xff]
    %v722 = vld [vmem:[#allocation9 + $0x220] sm:$0xff]
    %v723 = vld [vmem:[#allocation9 + $0x228] sm:$0xff]
    %v724 = vld [vmem:[#allocation9 + $0x230] sm:$0xff]
    %v725 = vld [vmem:[#allocation9 + $0x238] sm:$0xff]
    %v726 = vld [vmem:[#allocation9 + $0x240] sm:$0xff]
    %v727 = vld [vmem:[#allocation9 + $0x248] sm:$0xff]
    %v728 = vld [vmem:[#allocation9 + $0x250] sm:$0xff]
    %v729 = vld [vmem:[#allocation9 + $0x258] sm:$0xff]
    %v730 = vld [vmem:[#allocation9 + $0x260] sm:$0xff]
    %v731 = vld [vmem:[#allocation9 + $0x268] sm:$0xff]
    %v732 = vld [vmem:[#allocation9 + $0x270] sm:$0xff]
    %v733 = vld [vmem:[#allocation9 + $0x278] sm:$0xff]
    %v734 = vld [vmem:[#allocation9 + $0x280] sm:$0xff]
    %v735 = vld [vmem:[#allocation9 + $0x288] sm:$0xff]
    %v736 = vld [vmem:[#allocation9 + $0x290] sm:$0xff]
    %v737 = vld [vmem:[#allocation9 + $0x298] sm:$0xff]
    %v738 = vld [vmem:[#allocation9 + $0x2a0] sm:$0xff]
    %v739 = vld [vmem:[#allocation9 + $0x2a8] sm:$0xff]
    %v740 = vld [vmem:[#allocation9 + $0x2b0] sm:$0xff]
    %v741 = vld [vmem:[#allocation9 + $0x2b8] sm:$0xff]
    %v742 = vld [vmem:[#allocation9 + $0x2c0] sm:$0xff]
    %v743 = vld [vmem:[#allocation9 + $0x2c8] sm:$0xff]
    %v744 = vld [vmem:[#allocation9 + $0x2d0] sm:$0xff]
    %v745 = vld [vmem:[#allocation9 + $0x2d8] sm:$0xff]
    %v746 = vld [vmem:[#allocation9 + $0x2e0] sm:$0xff]
    %v747 = vld [vmem:[#allocation9 + $0x2e8] sm:$0xff]
    %v748 = vld [vmem:[#allocation9 + $0x2f0] sm:$0xff]
    %v749 = vld [vmem:[#allocation9 + $0x2f8] sm:$0xff]
    %v750 = vld [vmem:[#allocation9 + $0x300] sm:$0xff]
    %v751 = vld [vmem:[#allocation9 + $0x308] sm:$0xff]
    %v752 = vld [vmem:[#allocation9 + $0x310] sm:$0xff]
    %v753 = vld [vmem:[#allocation9 + $0x318] sm:$0xff]
    %v754 = vld [vmem:[#allocation9 + $0x320] sm:$0xff]
    %v755 = vld [vmem:[#allocation9 + $0x328] sm:$0xff]
    %v756 = vld [vmem:[#allocation9 + $0x330] sm:$0xff]
    %v757 = vld [vmem:[#allocation9 + $0x338] sm:$0xff]
    %v758 = vld [vmem:[#allocation9 + $0x340] sm:$0xff]
    %v759 = vld [vmem:[#allocation9 + $0x348] sm:$0xff]
    %v760 = vld [vmem:[#allocation9 + $0x350] sm:$0xff]
    %v761 = vld [vmem:[#allocation9 + $0x358] sm:$0xff]
    %v762 = vld [vmem:[#allocation9 + $0x360] sm:$0xff]
    %v763 = vld [vmem:[#allocation9 + $0x368] sm:$0xff]
    %v764 = vld [vmem:[#allocation9 + $0x370] sm:$0xff]
    %v765 = vld [vmem:[#allocation9 + $0x378] sm:$0xff]
    %v766 = vld [vmem:[#allocation9 + $0x380] sm:$0xff]
    %v767 = vld [vmem:[#allocation9 + $0x388] sm:$0xff]
    %v768 = vld [vmem:[#allocation9 + $0x390] sm:$0xff]
    %v769 = vld [vmem:[#allocation9 + $0x398] sm:$0xff]
    %v770 = vld [vmem:[#allocation9 + $0x3a0] sm:$0xff]
    %v771 = vld [vmem:[#allocation9 + $0x3a8] sm:$0xff]
    %v772 = vld [vmem:[#allocation9 + $0x3b0] sm:$0xff]
    %v773 = vld [vmem:[#allocation9 + $0x3b8] sm:$0xff]
    %v774 = vld [vmem:[#allocation9 + $0x3c0] sm:$0xff]
    %v775 = vld [vmem:[#allocation9 + $0x3c8] sm:$0xff]
    %v776 = vld [vmem:[#allocation9 + $0x3d0] sm:$0xff]
    %v777 = vld [vmem:[#allocation9 + $0x3d8] sm:$0xff]
    %v778 = vld [vmem:[#allocation9 + $0x3e0] sm:$0xff]
    %v779 = vld [vmem:[#allocation9 + $0x3e8] sm:$0xff]
    %v780 = vld [vmem:[#allocation9 + $0x3f0] sm:$0xff]
    %v781 = vld [vmem:[#allocation9 + $0x3f8] sm:$0xff]
    %v782 = vld [vmem:[#allocation9 + $0x400] sm:$0xff]
    %v783 = vld [vmem:[#allocation9 + $0x408] sm:$0xff]
    %v784 = vld [vmem:[#allocation9 + $0x410] sm:$0xff]
    %v785 = vld [vmem:[#allocation9 + $0x418] sm:$0xff]
    %v786 = vld [vmem:[#allocation9 + $0x420] sm:$0xff]
    %v787 = vld [vmem:[#allocation9 + $0x428] sm:$0xff]
    %v788 = vld [vmem:[#allocation9 + $0x430] sm:$0xff]
    %v789 = vld [vmem:[#allocation9 + $0x438] sm:$0xff]
    %v790 = vld [vmem:[#allocation9 + $0x440] sm:$0xff]
    %v791 = vld [vmem:[#allocation9 + $0x448] sm:$0xff]
    %v792 = vld [vmem:[#allocation9 + $0x450] sm:$0xff]
    %v793 = vld [vmem:[#allocation9 + $0x458] sm:$0xff]
    %v794 = vld [vmem:[#allocation9 + $0x460] sm:$0xff]
    %v795 = vld [vmem:[#allocation9 + $0x468] sm:$0xff]
    %v796 = vld [vmem:[#allocation9 + $0x470] sm:$0xff]
    %v797 = vld [vmem:[#allocation9 + $0x478] sm:$0xff]
    %v798 = vld [vmem:[#allocation9 + $0x480] sm:$0xff]
    %v799 = vld [vmem:[#allocation9 + $0x488] sm:$0xff]
    %v800 = vld [vmem:[#allocation9 + $0x490] sm:$0xff]
    %v801 = vld [vmem:[#allocation9 + $0x498] sm:$0xff]
    %v802 = vld [vmem:[#allocation9 + $0x4a0] sm:$0xff]
    %v803 = vld [vmem:[#allocation9 + $0x4a8] sm:$0xff]
    %v804 = vld [vmem:[#allocation9 + $0x4b0] sm:$0xff]
    %v805 = vld [vmem:[#allocation9 + $0x4b8] sm:$0xff]
    %v806 = vld [vmem:[#allocation9 + $0x4c0] sm:$0xff]
    %v807 = vld [vmem:[#allocation9 + $0x4c8] sm:$0xff]
    %v808 = vld [vmem:[#allocation9 + $0x4d0] sm:$0xff]
    %v809 = vld [vmem:[#allocation9 + $0x4d8] sm:$0xff]
    %v810 = vld [vmem:[#allocation9 + $0x4e0] sm:$0xff]
    %v811 = vld [vmem:[#allocation9 + $0x4e8] sm:$0xff]
    %v812 = vld [vmem:[#allocation9 + $0x4f0] sm:$0xff]
    %v813 = vld [vmem:[#allocation9 + $0x4f8] sm:$0xff]
    %v814 = vld [vmem:[#allocation9 + $0x500] sm:$0xff]
    %v815 = vld [vmem:[#allocation9 + $0x508] sm:$0xff]
    %v816 = vld [vmem:[#allocation9 + $0x510] sm:$0xff]
    %v817 = vld [vmem:[#allocation9 + $0x518] sm:$0xff]
    %v818 = vld [vmem:[#allocation9 + $0x520] sm:$0xff]
    %v819 = vld [vmem:[#allocation9 + $0x528] sm:$0xff]
    %v820 = vld [vmem:[#allocation9 + $0x530] sm:$0xff]
    %v821 = vld [vmem:[#allocation9 + $0x538] sm:$0xff]
    %v822 = vld [vmem:[#allocation9 + $0x540] sm:$0xff]
    %v823 = vld [vmem:[#allocation9 + $0x548] sm:$0xff]
    %v824 = vld [vmem:[#allocation9 + $0x550] sm:$0xff]
    %v825 = vld [vmem:[#allocation9 + $0x558] sm:$0xff]
    %v826 = vld [vmem:[#allocation9 + $0x560] sm:$0xff]
    %v827 = vld [vmem:[#allocation9 + $0x568] sm:$0xff]
    %v828 = vld [vmem:[#allocation9 + $0x570] sm:$0xff]
    %v829 = vld [vmem:[#allocation9 + $0x578] sm:$0xff]
    %v830 = vld [vmem:[#allocation9 + $0x580] sm:$0xff]
    %v831 = vld [vmem:[#allocation9 + $0x588] sm:$0xff]
    %v832 = vld [vmem:[#allocation9 + $0x590] sm:$0xff]
    %v833 = vld [vmem:[#allocation9 + $0x598] sm:$0xff]
    %v834 = vld [vmem:[#allocation9 + $0x5a0] sm:$0xff]
    %v835 = vld [vmem:[#allocation9 + $0x5a8] sm:$0xff]
    %v836 = vld [vmem:[#allocation9 + $0x5b0] sm:$0xff]
    %v837 = vld [vmem:[#allocation9 + $0x5b8] sm:$0xff]
    %v838 = vld [vmem:[#allocation9 + $0x5c0] sm:$0xff]
    %v839 = vld [vmem:[#allocation9 + $0x5c8] sm:$0xff]
    %v840 = vld [vmem:[#allocation9 + $0x5d0] sm:$0xff]
    %v841 = vld [vmem:[#allocation9 + $0x5d8] sm:$0xff]
    %v842 = vld [vmem:[#allocation9 + $0x5e0] sm:$0xff]
    %v843 = vld [vmem:[#allocation9 + $0x5e8] sm:$0xff]
    %v844 = vld [vmem:[#allocation9 + $0x5f0] sm:$0xff]
    %v845 = vld [vmem:[#allocation9 + $0x5f8] sm:$0xff]
    %v846 = vld [vmem:[#allocation9 + $0x600] sm:$0xff]
    %v847 = vld [vmem:[#allocation9 + $0x608] sm:$0xff]
    %v848 = vld [vmem:[#allocation9 + $0x610] sm:$0xff]
    %v849 = vld [vmem:[#allocation9 + $0x618] sm:$0xff]
    %v850 = vld [vmem:[#allocation9 + $0x620] sm:$0xff]
    %v851 = vld [vmem:[#allocation9 + $0x628] sm:$0xff]
    %v852 = vld [vmem:[#allocation9 + $0x630] sm:$0xff]
    %v853 = vld [vmem:[#allocation9 + $0x638] sm:$0xff]
    %v854 = vld [vmem:[#allocation9 + $0x640] sm:$0xff]
    %v855 = vld [vmem:[#allocation9 + $0x648] sm:$0xff]
    %v856 = vld [vmem:[#allocation9 + $0x650] sm:$0xff]
    %v857 = vld [vmem:[#allocation9 + $0x658] sm:$0xff]
    %v858 = vld [vmem:[#allocation9 + $0x660] sm:$0xff]
    %v859 = vld [vmem:[#allocation9 + $0x668] sm:$0xff]
    %v860 = vld [vmem:[#allocation9 + $0x670] sm:$0xff]
    %v861 = vld [vmem:[#allocation9 + $0x678] sm:$0xff]
    %v862 = vld [vmem:[#allocation9 + $0x680] sm:$0xff]
    %v863 = vld [vmem:[#allocation9 + $0x688] sm:$0xff]
    %v864 = vld [vmem:[#allocation9 + $0x690] sm:$0xff]
    %v865 = vld [vmem:[#allocation9 + $0x698] sm:$0xff]
    %v866 = vld [vmem:[#allocation9 + $0x6a0] sm:$0xff]
    %v867 = vld [vmem:[#allocation9 + $0x6a8] sm:$0xff]
    %v868 = vld [vmem:[#allocation9 + $0x6b0] sm:$0xff]
    %v869 = vld [vmem:[#allocation9 + $0x6b8] sm:$0xff]
    %v870 = vld [vmem:[#allocation9 + $0x6c0] sm:$0xff]
    %v871 = vld [vmem:[#allocation9 + $0x6c8] sm:$0xff]
    %v872 = vld [vmem:[#allocation9 + $0x6d0] sm:$0xff]
    %v873 = vld [vmem:[#allocation9 + $0x6d8] sm:$0xff]
    %v874 = vld [vmem:[#allocation9 + $0x6e0] sm:$0xff]
    %v875 = vld [vmem:[#allocation9 + $0x6e8] sm:$0xff]
    %v876 = vld [vmem:[#allocation9 + $0x6f0] sm:$0xff]
    %v877 = vld [vmem:[#allocation9 + $0x6f8] sm:$0xff]
    %v878 = vld [vmem:[#allocation9 + $0x700] sm:$0xff]
    %v879 = vld [vmem:[#allocation9 + $0x708] sm:$0xff]
    %v880 = vld [vmem:[#allocation9 + $0x710] sm:$0xff]
    %v881 = vld [vmem:[#allocation9 + $0x718] sm:$0xff]
    %v882 = vld [vmem:[#allocation9 + $0x720] sm:$0xff]
    %v883 = vld [vmem:[#allocation9 + $0x728] sm:$0xff]
    %v884 = vld [vmem:[#allocation9 + $0x730] sm:$0xff]
    %v885 = vld [vmem:[#allocation9 + $0x738] sm:$0xff]
    %v886 = vld [vmem:[#allocation9 + $0x740] sm:$0xff]
    %v887 = vld [vmem:[#allocation9 + $0x748] sm:$0xff]
    %v888 = vld [vmem:[#allocation9 + $0x750] sm:$0xff]
    %v889 = vld [vmem:[#allocation9 + $0x758] sm:$0xff]
    %v890 = vld [vmem:[#allocation9 + $0x760] sm:$0xff]
    %v891 = vld [vmem:[#allocation9 + $0x768] sm:$0xff]
    %v892 = vld [vmem:[#allocation9 + $0x770] sm:$0xff]
    %v893 = vld [vmem:[#allocation9 + $0x778] sm:$0xff]
    %v894 = vld [vmem:[#allocation9 + $0x780] sm:$0xff]
    %v895 = vld [vmem:[#allocation9 + $0x788] sm:$0xff]
    %v896 = vld [vmem:[#allocation9 + $0x790] sm:$0xff]
    %v897 = vld [vmem:[#allocation9 + $0x798] sm:$0xff]
    %v898 = vld [vmem:[#allocation9 + $0x7a0] sm:$0xff]
    %v899 = vld [vmem:[#allocation9 + $0x7a8] sm:$0xff]
    %v900 = vld [vmem:[#allocation9 + $0x7b0] sm:$0xff]
    %v901 = vld [vmem:[#allocation9 + $0x7b8] sm:$0xff]
    %v902 = vld [vmem:[#allocation9 + $0x7c0] sm:$0xff]
    %v903 = vld [vmem:[#allocation9 + $0x7c8] sm:$0xff]
    %v904 = vld [vmem:[#allocation9 + $0x7d0] sm:$0xff]
    %v905 = vld [vmem:[#allocation9 + $0x7d8] sm:$0xff]
    %v906 = vld [vmem:[#allocation9 + $0x7e0] sm:$0xff]
    %v907 = vld [vmem:[#allocation9 + $0x7e8] sm:$0xff]
    %v908 = vld [vmem:[#allocation9 + $0x7f0] sm:$0xff]
    %v909 = vld [vmem:[#allocation9 + $0x7f8] sm:$0xff]
    %v910 = vld [vmem:[%s5] sm:$0xf]
    %v912 = vlaneseq
    %v913 = vshrl.u32 %v912, 7
    %v914 = vsub.s32 0, %v913
    %v915 = vrot.slane %v910, %v914
    %v916 = vlaneseq
    %v917 = vshrl.u32 %v916, 7
    %v918 = vsub.s32 1, %v917
    %v919 = vrot.slane %v910, %v918
    %v920 = vlaneseq
    %v921 = vshrl.u32 %v920, 7
    %v922 = vsub.s32 2, %v921
    %v923 = vrot.slane %v910, %v922
    %v924 = vlaneseq
    %v925 = vshrl.u32 %v924, 7
    %v926 = vsub.s32 3, %v925
    %v927 = vrot.slane %v910, %v926
    %932 = vmatprep.subr.mxu0 %v655
    %933 = vmatpush1.msra.mxu0 %v654
    %934 = vmatprep.subr.mxu0 %v659
    %935 = vmatpush1.msra.mxu0 %v658
    %936 = vmatprep.subr.mxu0 %v663
    %937 = vmatpush1.msra.mxu0 %v662
    %938 = vmatprep.subr.mxu0 %v667
    %939 = vmatpush1.msra.mxu0 %v666
    %940 = vmatprep.subr.mxu0 %v671
    %941 = vmatpush1.msra.mxu0 %v670
    %942 = vmatprep.subr.mxu0 %v675
    %943 = vmatpush1.msra.mxu0 %v674
    %944 = vmatprep.subr.mxu0 %v679
    %945 = vmatpush1.msra.mxu0 %v678
    %946 = vmatprep.subr.mxu0 %v683
    %947 = vmatpush1.msra.mxu0 %v682
    %948 = vmatprep.subr.mxu0 %v687
    %949 = vmatpush1.msra.mxu0 %v686
    %950 = vmatprep.subr.mxu0 %v691
    %951 = vmatpush1.msra.mxu0 %v690
    %952 = vmatprep.subr.mxu0 %v695
    %953 = vmatpush1.msra.mxu0 %v694
    %954 = vmatprep.subr.mxu0 %v699
    %955 = vmatpush1.msra.mxu0 %v698
    %956 = vmatprep.subr.mxu0 %v703
    %957 = vmatpush1.msra.mxu0 %v702
    %958 = vmatprep.subr.mxu0 %v707
    %959 = vmatpush1.msra.mxu0 %v706
    %960 = vmatprep.subr.mxu0 %v711
    %961 = vmatpush1.msra.mxu0 %v710
    %962 = vmatprep.subr.mxu0 %v715
    %963 = vmatpush1.msra.mxu0 %v714
    %964 = vmatprep.subr.mxu0 %v719
    %965 = vmatpush1.msra.mxu0 %v718
    %966 = vmatprep.subr.mxu0 %v723
    %967 = vmatpush1.msra.mxu0 %v722
    %968 = vmatprep.subr.mxu0 %v727
    %969 = vmatpush1.msra.mxu0 %v726
    %970 = vmatprep.subr.mxu0 %v731
    %971 = vmatpush1.msra.mxu0 %v730
    %972 = vmatprep.subr.mxu0 %v735
    %973 = vmatpush1.msra.mxu0 %v734
    %974 = vmatprep.subr.mxu0 %v739
    %975 = vmatpush1.msra.mxu0 %v738
    %976 = vmatprep.subr.mxu0 %v743
    %977 = vmatpush1.msra.mxu0 %v742
    %978 = vmatprep.subr.mxu0 %v747
    %979 = vmatpush1.msra.mxu0 %v746
    %980 = vmatprep.subr.mxu0 %v751
    %981 = vmatpush1.msra.mxu0 %v750
    %982 = vmatprep.subr.mxu0 %v755
    %983 = vmatpush1.msra.mxu0 %v754
    %984 = vmatprep.subr.mxu0 %v759
    %985 = vmatpush1.msra.mxu0 %v758
    %986 = vmatprep.subr.mxu0 %v763
    %987 = vmatpush1.msra.mxu0 %v762
    %988 = vmatprep.subr.mxu0 %v767
    %989 = vmatpush1.msra.mxu0 %v766
    %990 = vmatprep.subr.mxu0 %v771
    %991 = vmatpush1.msra.mxu0 %v770
    %992 = vmatprep.subr.mxu0 %v775
    %993 = vmatpush1.msra.mxu0 %v774
    %994 = vmatprep.subr.mxu0 %v779
    %995 = vmatpush1.msra.mxu0 %v778
    %996 = vmatprep.mubr.f32.mxu0 %v643
    %997 = vmatmul.mubr.f32.gmra.mrb[0].mxu0 %v642
    %v998 = vpop.f32.mrb[0].mxu0
    %v999 = vadd.f32 %v915, %v998
    %v1000 = vpop.f32.mrb[0].mxu0
    %v1001 = vadd.f32 %v919, %v1000
    %1002 = vmatprep.mubr.f32.mxu0 %v647
    %1003 = vmatmul.mubr.f32.gmra.mrb[0].mxu0 %v646
    %v1004 = vpop.f32.mrb[0].mxu0
    %v1005 = vadd.f32 %v915, %v1004
    %v1006 = vpop.f32.mrb[0].mxu0
    %v1007 = vadd.f32 %v919, %v1006
    %1008 = vmatprep.mubr.f32.mxu0 %v651
    %1009 = vmatmul.mubr.f32.gmra.mrb[0].mxu0 %v650
    %v1010 = vpop.f32.mrb[0].mxu0
    %v1011 = vadd.f32 %v915, %v1010
    %v1012 = vpop.f32.mrb[0].mxu0
    %v1013 = vadd.f32 %v919, %v1012
    %1014 = vdwg.mxu0
    %1015 = vmatprep.subr.mxu0 %v783
    %1016 = vmatpush1.msra.mxu0 %v782
    %1017 = vmatprep.subr.mxu0 %v787
    %1018 = vmatpush1.msra.mxu0 %v786
    %1019 = vmatprep.subr.mxu0 %v791
    %1020 = vmatpush1.msra.mxu0 %v790
    %1021 = vmatprep.subr.mxu0 %v795
    %1022 = vmatpush1.msra.mxu0 %v794
    %1023 = vmatprep.subr.mxu0 %v799
    %1024 = vmatpush1.msra.mxu0 %v798
    %1025 = vmatprep.subr.mxu0 %v803
    %1026 = vmatpush1.msra.mxu0 %v802
    %1027 = vmatprep.subr.mxu0 %v807
    %1028 = vmatpush1.msra.mxu0 %v806
    %1029 = vmatprep.subr.mxu0 %v811
    %1030 = vmatpush1.msra.mxu0 %v810
    %1031 = vmatprep.subr.mxu0 %v815
    %1032 = vmatpush1.msra.mxu0 %v814
    %1033 = vmatprep.subr.mxu0 %v819
    %1034 = vmatpush1.msra.mxu0 %v818
    %1035 = vmatprep.subr.mxu0 %v823
    %1036 = vmatpush1.msra.mxu0 %v822
    %1037 = vmatprep.subr.mxu0 %v827
    %1038 = vmatpush1.msra.mxu0 %v826
    %1039 = vmatprep.subr.mxu0 %v831
    %1040 = vmatpush1.msra.mxu0 %v830
    %1041 = vmatprep.subr.mxu0 %v835
    %1042 = vmatpush1.msra.mxu0 %v834
    %1043 = vmatprep.subr.mxu0 %v839
    %1044 = vmatpush1.msra.mxu0 %v838
    %1045 = vmatprep.subr.mxu0 %v843
    %1046 = vmatpush1.msra.mxu0 %v842
    %1047 = vmatprep.subr.mxu0 %v847
    %1048 = vmatpush1.msra.mxu0 %v846
    %1049 = vmatprep.subr.mxu0 %v851
    %1050 = vmatpush1.msra.mxu0 %v850
    %1051 = vmatprep.subr.mxu0 %v855
    %1052 = vmatpush1.msra.mxu0 %v854
    %1053 = vmatprep.subr.mxu0 %v859
    %1054 = vmatpush1.msra.mxu0 %v858
    %1055 = vmatprep.subr.mxu0 %v863
    %1056 = vmatpush1.msra.mxu0 %v862
    %1057 = vmatprep.subr.mxu0 %v867
    %1058 = vmatpush1.msra.mxu0 %v866
    %1059 = vmatprep.subr.mxu0 %v871
    %1060 = vmatpush1.msra.mxu0 %v870
    %1061 = vmatprep.subr.mxu0 %v875
    %1062 = vmatpush1.msra.mxu0 %v874
    %1063 = vmatprep.subr.mxu0 %v879
    %1064 = vmatpush1.msra.mxu0 %v878
    %1065 = vmatprep.subr.mxu0 %v883
    %1066 = vmatpush1.msra.mxu0 %v882
    %1067 = vmatprep.subr.mxu0 %v887
    %1068 = vmatpush1.msra.mxu0 %v886
    %1069 = vmatprep.subr.mxu0 %v891
    %1070 = vmatpush1.msra.mxu0 %v890
    %1071 = vmatprep.subr.mxu0 %v895
    %1072 = vmatpush1.msra.mxu0 %v894
    %1073 = vmatprep.subr.mxu0 %v899
    %1074 = vmatpush1.msra.mxu0 %v898
    %1075 = vmatprep.subr.mxu0 %v903
    %1076 = vmatpush1.msra.mxu0 %v902
    %1077 = vmatprep.subr.mxu0 %v907
    %1078 = vmatpush1.msra.mxu0 %v906
    %1079 = vmatprep.mubr.f32.mxu0 %v645
    %1080 = vmatmul.mubr.f32.gmra.mrb[0].mxu0 %v644
    %v1081 = vpop.f32.mrb[0].mxu0
    %v1082 = vadd.f32 %v999, %v1081
    %v1083 = vpop.f32.mrb[0].mxu0
    %v1084 = vadd.f32 %v1001, %v1083
    %1085 = vmatprep.mubr.f32.mxu0 %v649
    %1086 = vmatmul.mubr.f32.gmra.mrb[0].mxu0 %v648
    %v1087 = vpop.f32.mrb[0].mxu0
    %v1088 = vadd.f32 %v1005, %v1087
    %v1089 = vpop.f32.mrb[0].mxu0
    %v1090 = vadd.f32 %v1007, %v1089
    %1091 = vmatprep.mubr.f32.mxu0 %v653
    %1092 = vmatmul.mubr.f32.gmra.mrb[0].mxu0 %v652
    %v1093 = vpop.f32.mrb[0].mxu0
    %v1094 = vadd.f32 %v1011, %v1093
    %v1095 = vpop.f32.mrb[0].mxu0
    %v1096 = vadd.f32 %v1013, %v1095
    %1097 = vdwg.mxu0
    %1098 = vmatprep.subr.mxu0 %v657
    %1099 = vmatpush1.msra.mxu0 %v656
    %1100 = vmatprep.subr.mxu0 %v661
    %1101 = vmatpush1.msra.mxu0 %v660
    %1102 = vmatprep.subr.mxu0 %v665
    %1103 = vmatpush1.msra.mxu0 %v664
    %1104 = vmatprep.subr.mxu0 %v669
    %1105 = vmatpush1.msra.mxu0 %v668
    %1106 = vmatprep.subr.mxu0 %v673
    %1107 = vmatpush1.msra.mxu0 %v672
    %1108 = vmatprep.subr.mxu0 %v677
    %1109 = vmatpush1.msra.mxu0 %v676
    %1110 = vmatprep.subr.mxu0 %v681
    %1111 = vmatpush1.msra.mxu0 %v680
    %1112 = vmatprep.subr.mxu0 %v685
    %1113 = vmatpush1.msra.mxu0 %v684
    %1114 = vmatprep.subr.mxu0 %v689
    %1115 = vmatpush1.msra.mxu0 %v688
    %1116 = vmatprep.subr.mxu0 %v693
    %1117 = vmatpush1.msra.mxu0 %v692
    %1118 = vmatprep.subr.mxu0 %v697
    %1119 = vmatpush1.msra.mxu0 %v696
    %1120 = vmatprep.subr.mxu0 %v701
    %1121 = vmatpush1.msra.mxu0 %v700
    %1122 = vmatprep.subr.mxu0 %v705
    %1123 = vmatpush1.msra.mxu0 %v704
    %1124 = vmatprep.subr.mxu0 %v709
    %1125 = vmatpush1.msra.mxu0 %v708
    %1126 = vmatprep.subr.mxu0 %v713
    %1127 = vmatpush1.msra.mxu0 %v712
    %1128 = vmatprep.subr.mxu0 %v717
    %1129 = vmatpush1.msra.mxu0 %v716
    %1130 = vmatprep.subr.mxu0 %v721
    %1131 = vmatpush1.msra.mxu0 %v720
    %1132 = vmatprep.subr.mxu0 %v725
    %1133 = vmatpush1.msra.mxu0 %v724
    %1134 = vmatprep.subr.mxu0 %v729
    %1135 = vmatpush1.msra.mxu0 %v728
    %1136 = vmatprep.subr.mxu0 %v733
    %1137 = vmatpush1.msra.mxu0 %v732
    %1138 = vmatprep.subr.mxu0 %v737
    %1139 = vmatpush1.msra.mxu0 %v736
    %1140 = vmatprep.subr.mxu0 %v741
    %1141 = vmatpush1.msra.mxu0 %v740
    %1142 = vmatprep.subr.mxu0 %v745
    %1143 = vmatpush1.msra.mxu0 %v744
    %1144 = vmatprep.subr.mxu0 %v749
    %1145 = vmatpush1.msra.mxu0 %v748
    %1146 = vmatprep.subr.mxu0 %v753
    %1147 = vmatpush1.msra.mxu0 %v752
    %1148 = vmatprep.subr.mxu0 %v757
    %1149 = vmatpush1.msra.mxu0 %v756
    %1150 = vmatprep.subr.mxu0 %v761
    %1151 = vmatpush1.msra.mxu0 %v760
    %1152 = vmatprep.subr.mxu0 %v765
    %1153 = vmatpush1.msra.mxu0 %v764
    %1154 = vmatprep.subr.mxu0 %v769
    %1155 = vmatpush1.msra.mxu0 %v768
    %1156 = vmatprep.subr.mxu0 %v773
    %1157 = vmatpush1.msra.mxu0 %v772
    %1158 = vmatprep.subr.mxu0 %v777
    %1159 = vmatpush1.msra.mxu0 %v776
    %1160 = vmatprep.subr.mxu0 %v781
    %1161 = vmatpush1.msra.mxu0 %v780
    %1162 = vmatprep.mubr.f32.mxu0 %v643
    %1163 = vmatmul.mubr.f32.gmra.mrb[0].mxu0 %v642
    %v1164 = vpop.f32.mrb[0].mxu0
    %v1165 = vadd.f32 %v923, %v1164
    %v1166 = vpop.f32.mrb[0].mxu0
    %v1167 = vadd.f32 %v927, %v1166
    %1168 = vmatprep.mubr.f32.mxu0 %v647
    %1169 = vmatmul.mubr.f32.gmra.mrb[0].mxu0 %v646
    %v1170 = vpop.f32.mrb[0].mxu0
    %v1171 = vadd.f32 %v923, %v1170
    %v1172 = vpop.f32.mrb[0].mxu0
    %v1173 = vadd.f32 %v927, %v1172
    %1174 = vmatprep.mubr.f32.mxu0 %v651
    %1175 = vmatmul.mubr.f32.gmra.mrb[0].mxu0 %v650
    %v1176 = vpop.f32.mrb[0].mxu0
    %v1177 = vadd.f32 %v923, %v1176
    %v1178 = vpop.f32.mrb[0].mxu0
    %v1179 = vadd.f32 %v927, %v1178
    %1180 = vdwg.mxu0
    %1181 = vmatprep.subr.mxu0 %v785
    %1182 = vmatpush1.msra.mxu0 %v784
    %1183 = vmatprep.subr.mxu0 %v789
    %1184 = vmatpush1.msra.mxu0 %v788
    %1185 = vmatprep.subr.mxu0 %v793
    %1186 = vmatpush1.msra.mxu0 %v792
    %1187 = vmatprep.subr.mxu0 %v797
    %1188 = vmatpush1.msra.mxu0 %v796
    %1189 = vmatprep.subr.mxu0 %v801
    %1190 = vmatpush1.msra.mxu0 %v800
    %1191 = vmatprep.subr.mxu0 %v805
    %1192 = vmatpush1.msra.mxu0 %v804
    %1193 = vmatprep.subr.mxu0 %v809
    %1194 = vmatpush1.msra.mxu0 %v808
    %1195 = vmatprep.subr.mxu0 %v813
    %1196 = vmatpush1.msra.mxu0 %v812
    %1197 = vmatprep.subr.mxu0 %v817
    %1198 = vmatpush1.msra.mxu0 %v816
    %1199 = vmatprep.subr.mxu0 %v821
    %1200 = vmatpush1.msra.mxu0 %v820
    %1201 = vmatprep.subr.mxu0 %v825
    %1202 = vmatpush1.msra.mxu0 %v824
    %1203 = vmatprep.subr.mxu0 %v829
    %1204 = vmatpush1.msra.mxu0 %v828
    %1205 = vmatprep.subr.mxu0 %v833
    %1206 = vmatpush1.msra.mxu0 %v832
    %1207 = vmatprep.subr.mxu0 %v837
    %1208 = vmatpush1.msra.mxu0 %v836
    %1209 = vmatprep.subr.mxu0 %v841
    %1210 = vmatpush1.msra.mxu0 %v840
    %1211 = vmatprep.subr.mxu0 %v845
    %1212 = vmatpush1.msra.mxu0 %v844
    %1213 = vmatprep.subr.mxu0 %v849
    %1214 = vmatpush1.msra.mxu0 %v848
    %1215 = vmatprep.subr.mxu0 %v853
    %1216 = vmatpush1.msra.mxu0 %v852
    %1217 = vmatprep.subr.mxu0 %v857
    %1218 = vmatpush1.msra.mxu0 %v856
    %1219 = vmatprep.subr.mxu0 %v861
    %1220 = vmatpush1.msra.mxu0 %v860
    %1221 = vmatprep.subr.mxu0 %v865
    %1222 = vmatpush1.msra.mxu0 %v864
    %1223 = vmatprep.subr.mxu0 %v869
    %1224 = vmatpush1.msra.mxu0 %v868
    %1225 = vmatprep.subr.mxu0 %v873
    %1226 = vmatpush1.msra.mxu0 %v872
    %1227 = vmatprep.subr.mxu0 %v877
    %1228 = vmatpush1.msra.mxu0 %v876
    %1229 = vmatprep.subr.mxu0 %v881
    %1230 = vmatpush1.msra.mxu0 %v880
    %1231 = vmatprep.subr.mxu0 %v885
    %1232 = vmatpush1.msra.mxu0 %v884
    %1233 = vmatprep.subr.mxu0 %v889
    %1234 = vmatpush1.msra.mxu0 %v888
    %1235 = vmatprep.subr.mxu0 %v893
    %1236 = vmatpush1.msra.mxu0 %v892
    %1237 = vmatprep.subr.mxu0 %v897
    %1238 = vmatpush1.msra.mxu0 %v896
    %1239 = vmatprep.subr.mxu0 %v901
    %1240 = vmatpush1.msra.mxu0 %v900
    %1241 = vmatprep.subr.mxu0 %v905
    %1242 = vmatpush1.msra.mxu0 %v904
    %1243 = vmatprep.subr.mxu0 %v909
    %1244 = vmatpush1.msra.mxu0 %v908
    %1245 = vmatprep.mubr.f32.mxu0 %v645
    %1246 = vmatmul.mubr.f32.gmra.mrb[0].mxu0 %v644
    %v1247 = vpop.f32.mrb[0].mxu0
    %v1248 = vadd.f32 %v1165, %v1247
    %v1249 = vpop.f32.mrb[0].mxu0
    %v1250 = vadd.f32 %v1167, %v1249
    %1251 = vmatprep.mubr.f32.mxu0 %v649
    %1252 = vmatmul.mubr.f32.gmra.mrb[0].mxu0 %v648
    %v1253 = vpop.f32.mrb[0].mxu0
    %v1254 = vadd.f32 %v1171, %v1253
    %v1255 = vpop.f32.mrb[0].mxu0
    %v1256 = vadd.f32 %v1173, %v1255
    %1257 = vmatprep.mubr.f32.mxu0 %v653
    %1258 = vmatmul.mubr.f32.gmra.mrb[0].mxu0 %v652
    %v1259 = vpop.f32.mrb[0].mxu0
    %v1260 = vadd.f32 %v1177, %v1259
    %v1261 = vpop.f32.mrb[0].mxu0
    %v1262 = vadd.f32 %v1179, %v1261
    %1263 = vdwg.mxu0
    %v1264 = vmax.f32 %v1250, 0.0
    %v1265 = vmax.f32 %v1256, 0.0
    %v1266 = vmax.f32 %v1262, 0.0
    %v1267 = vmul.f32 %v93, %v93
    %v1268 = vmul.f32 %v94, %v94
    %v1269 = vmul.f32 %v95, %v95
    %v1270 = vadd.f32 %v1267, %v1268
    %v1271 = vadd.f32 %v1270, %v1269
    %1272 = vadd.xlane.f32.xlu0 %v1271
    %v1273 = vpop.xlane.xlu0 %1272
    %v1274 = vrsqrt.pop %v1273
    %v1275 = vmul.f32 %v1082, %v93
    %v1276 = vmul.f32 %v1084, %v94
    %v1277 = vmul.f32 %v1248, %v95
    %v1278 = vmul.f32 %v1088, %v93
    %v1279 = vmul.f32 %v1090, %v94
    %v1280 = vmul.f32 %v1254, %v95
    %v1281 = vmul.f32 %v1094, %v93
    %v1282 = vmul.f32 %v1096, %v94
    %v1283 = vmul.f32 %v1260, %v95
    %v1284 = vadd.f32 %v1275, %v1276
    %v1285 = vadd.f32 %v1284, %v1277
    %1286 = vadd.xlane.f32.xlu0 %v1285
    %v1287 = vpop.xlane.xlu0 %1286
    %v1288 = vadd.f32 %v1278, %v1279
    %v1289 = vadd.f32 %v1288, %v1280
    %1290 = vadd.xlane.f32.xlu0 %v1289
    %v1291 = vpop.xlane.xlu0 %1290
    %v1292 = vadd.f32 %v1281, %v1282
    %v1293 = vadd.f32 %v1292, %v1283
    %1294 = vadd.xlane.f32.xlu0 %v1293
    %v1295 = vpop.xlane.xlu0 %1294
    %v1296 = vmul.f32 %v1082, %v1082
    %v1297 = vmul.f32 %v1084, %v1084
    %v1298 = vmul.f32 %v1248, %v1248
    %v1299 = vmul.f32 %v1088, %v1088
    %v1300 = vmul.f32 %v1090, %v1090
    %v1301 = vmul.f32 %v1254, %v1254
    %v1302 = vmul.f32 %v1094, %v1094
    %v1303 = vmul.f32 %v1096, %v1096
    %v1304 = vmul.f32 %v1260, %v1260
    %v1305 = vadd.f32 %v1296, %v1297
    %v1306 = vadd.f32 %v1305, %v1298
    %1307 = vadd.xlane.f32.xlu0 %v1306
    %v1308 = vpop.xlane.xlu0 %1307
    %v1309 = vadd.f32 %v1299, %v1300
    %v1310 = vadd.f32 %v1309, %v1301
    %1311 = vadd.xlane.f32.xlu0 %v1310
    %v1312 = vpop.xlane.xlu0 %1311
    %v1313 = vadd.f32 %v1302, %v1303
    %v1314 = vadd.f32 %v1313, %v1304
    %1315 = vadd.xlane.f32.xlu0 %v1314
    %v1316 = vpop.xlane.xlu0 %1315
    %v1317 = vrsqrt.pop %v1308
    %v1318 = vrsqrt.pop %v1312
    %v1319 = vrsqrt.pop %v1316
    %v1320 = vmul.f32 %v1287, %v1317
    %v1321 = vmul.f32 %v1291, %v1318
    %v1322 = vmul.f32 %v1295, %v1319
    %v1323 = vmul.f32 %v1320, %v1274
    %v1324 = vmul.f32 %v1321, %v1274
    %v1325 = vmul.f32 %v1322, %v1274
    %v1326 = vsub.f32 1.0, %v1323
    %v1327 = vsub.f32 1.0, %v1324
    %v1328 = vsub.f32 1.0, %v1325
    %v1329 = vmul.f32 %v1326, 0.5
    %v1330 = vmul.f32 %v1327, 0.5
    %v1331 = vmul.f32 %v1328, 0.5
    %vm1332 = vcmask 7168
    %v1333 = vsel %vm1332, %v1329, 0.0
    %v1334 = vsel %vm1332, %v1330, 0.0
    %v1335 = vadd.f32 %v1333, %v1334
    %v1336 = vsel %vm1332, %v1331, 0.0
    %v1337 = vadd.f32 %v1335, %v1336
    %v1338 = vrot.slane %v1337, 4
    %v1339 = vadd.f32 %v1337, %v1338
    %v1340 = vrot.slane %v1339, 2
    %v1341 = vadd.f32 %v1339, %v1340
    %v1342 = vrot.slane %v1341, 1
    %v1343 = vadd.f32 %v1341, %v1342
    %v1344 = vmul.f32 %v1343, 0.125
    %v1345 = vld [vmem:[%s6] sm:$0x1]
    %v1347 = vlaneseq
    %v1348 = vshrl.u32 %v1347, 7
    %v1349 = vsub.s32 0, %v1348
    %v1350 = vrot.slane %v1345, %v1349
    %v1352 = vmul.f32 %v1264, %v1350
    %v1353 = vmul.f32 %v1265, %v1350
    %v1354 = vmul.f32 %v1266, %v1350
    %1355 = vadd.xlane.f32.xlu0 %v1352
    %v1356 = vpop.xlane.xlu0 %1355
    %1357 = vadd.xlane.f32.xlu0 %v1353
    %v1358 = vpop.xlane.xlu0 %1357
    %1359 = vadd.xlane.f32.xlu0 %v1354
    %v1360 = vpop.xlane.xlu0 %1359
    %s1361 = sld [smem:[#allocation2]]
    %v1362 = vstv %s1361
    %v1363 = vadd.f32 %v1356, %v1362
    %v1364 = vadd.f32 %v1358, %v1362
    %v1365 = vadd.f32 %v1360, %v1362
    %v1366 = vlaneseq
    %v1367 = vshrl.u32 %v1366, 7
    %v1368 = vadd.s32 %v1367, 8
    %v1369 = vadd.s32 %v1367, 16
    %vm1370 = vcmp.lt.s32.totalorder %v1367, 8
    %vm1371 = vcmp.lt.s32.totalorder %v1368, 8
    %vm1372 = vcmp.lt.s32.totalorder %v1369, 8
    %v1373 = vsub.f32 0.0, %v1363
    %v1374 = vsub.f32 0.0, %v1364
    %v1375 = vsub.f32 0.0, %v1365
    %v1376 = vsel %vm1370, %v1363, %v1373
    %v1377 = vsel %vm1371, %v1364, %v1374
    %v1378 = vsel %vm1372, %v1365, %v1375
    %v1379 = vmax.f32 %v1376, 0.0
    %v1380 = vmax.f32 %v1377, 0.0
    %v1381 = vmax.f32 %v1378, 0.0
    %v1382 = vand.u32 2147483647, %v1376
    %v1383 = vand.u32 2147483647, %v1377
    %v1384 = vand.u32 2147483647, %v1378
    %v1385 = vsub.f32 0.0, %v1382
    %v1386 = vsub.f32 0.0, %v1383
    %v1387 = vsub.f32 0.0, %v1384
    %v1388 = vmul.f32 %v1385, 1.442695
    %v1389 = vpow.pop %v1388
    %v1390 = vmul.f32 %v1386, 1.442695
    %v1391 = vpow.pop %v1390
    %v1392 = vmul.f32 %v1387, 1.442695
    %v1393 = vpow.pop %v1392
    %v1394 = vadd.f32 %v1389, 1.0
    %v1395 = vadd.f32 %v1391, 1.0
    %v1396 = vadd.f32 %v1393, 1.0
    %v1397 = vlog2.pop %v1394
    %v1398 = vmul.f32 %v1397, 0.6931472
    %v1399 = vlog2.pop %v1395
    %v1400 = vmul.f32 %v1399, 0.6931472
    %v1401 = vlog2.pop %v1396
    %v1402 = vmul.f32 %v1401, 0.6931472
    %v1403 = vadd.f32 %v1379, %v1398
    %v1404 = vadd.f32 %v1380, %v1400
    %v1405 = vadd.f32 %v1381, %v1402
    %v1406 = vmin.f32 %v1403, 100.0
    %v1407 = vmin.f32 %v1404, 100.0
    %v1408 = vmin.f32 %v1405, 100.0
    %v1409 = vadd.f32 %v1406, %v1407
    %v1410 = vadd.f32 %v1409, %v1408
    %v1411 = vrot.slane %v1410, 4
    %v1412 = vadd.f32 %v1410, %v1411
    %v1413 = vrot.slane %v1412, 2
    %v1414 = vadd.f32 %v1412, %v1413
    %v1415 = vrot.slane %v1414, 1
    %v1416 = vadd.f32 %v1414, %v1415
    %v1417 = vmul.f32 %v1416, 0.041666668
    %v1418 = vlaneseq
    %v1419 = vand.u32 %v1418, 127
    %v1420 = vadd.s32 %v1419, 128
    %v1421 = vadd.s32 %v1419, 256
    %vm1422 = vcmp.lt.s32.totalorder %v1419, 300
    %vm1423 = vcmp.lt.s32.totalorder %v1420, 300
    %vm1424 = vcmp.lt.s32.totalorder %v1421, 300
    %v1425 = vsub.f32 %v84, %v87
    %v1426 = vsub.f32 %v85, %v88
    %v1427 = vsub.f32 %v86, %v89
    %v1428 = vadd.f32 %v1425, 1e-06
    %v1429 = vadd.f32 %v1426, 1e-06
    %v1430 = vadd.f32 %v1427, 1e-06
    %v1431 = vsel %vm1422, %v1428, 0.0
    %v1432 = vsel %vm1423, %v1429, 0.0
    %v1433 = vsel %vm1424, %v1430, 0.0
    %v1434 = vsub.f32 %v84, %v90
    %v1435 = vsub.f32 %v85, %v91
    %v1436 = vsub.f32 %v86, %v92
    %v1437 = vadd.f32 %v1434, 1e-06
    %v1438 = vadd.f32 %v1435, 1e-06
    %v1439 = vadd.f32 %v1436, 1e-06
    %v1440 = vsel %vm1422, %v1437, 0.0
    %v1441 = vsel %vm1423, %v1438, 0.0
    %v1442 = vsel %vm1424, %v1439, 0.0
    %v1443 = vmul.f32 %v1431, %v1431
    %v1444 = vmul.f32 %v1432, %v1432
    %v1445 = vmul.f32 %v1433, %v1433
    %v1446 = vadd.f32 %v1443, %v1444
    %v1447 = vadd.f32 %v1446, %v1445
    %1448 = vadd.xlane.f32.xlu0 %v1447
    %v1449 = vpop.xlane.xlu0 %1448
    %v1450 = vrsqrt.pop %v1449
    %v1451 = vmul.f32 %v1449, %v1450
    %vm1452 = vcmp.eq.f32.partialorder %v1449, inf
    %v1453 = vsel %vm1452, %v1449, %v1451
    %vm1454 = vcmp.eq.f32.partialorder %v1449, 0.0
    %v1455 = vand.u32 %v1449, 2147483648
    %v1456 = vsel %vm1454, %v1455, %v1453
    %v1457 = vmul.f32 %v1440, %v1440
    %v1458 = vmul.f32 %v1441, %v1441
    %v1459 = vmul.f32 %v1442, %v1442
    %v1460 = vadd.f32 %v1457, %v1458
    %v1461 = vadd.f32 %v1460, %v1459
    %1462 = vadd.xlane.f32.xlu0 %v1461
    %v1463 = vpop.xlane.xlu0 %1462
    %v1464 = vrsqrt.pop %v1463
    %v1465 = vmul.f32 %v1463, %v1464
    %vm1466 = vcmp.eq.f32.partialorder %v1463, inf
    %v1467 = vsel %vm1466, %v1463, %v1465
    %vm1468 = vcmp.eq.f32.partialorder %v1463, 0.0
    %v1469 = vand.u32 %v1463, 2147483648
    %v1470 = vsel %vm1468, %v1469, %v1467
    %v1471 = vsub.f32 %v1456, %v1470
    %v1472 = vadd.f32 %v1471, 1.0
    %v1473 = vmax.f32 %v1472, 0.0
    %v1474 = vrot.slane %v1473, 4
    %v1475 = vadd.f32 %v1473, %v1474
    %v1476 = vrot.slane %v1475, 2
    %v1477 = vadd.f32 %v1475, %v1476
    %v1478 = vrot.slane %v1477, 1
    %v1479 = vadd.f32 %v1477, %v1478
    %v1480 = vmul.f32 %v1479, 0.125
    %vm1481 = vcmp.eq.s32.totalorder %v1419, 0
    %vm1482 = vcmp.eq.s32.totalorder %v1419, 1
    %vm1483 = vcmp.eq.s32.totalorder %v1419, 2
    %v1484 = vsel %vm1483, %v1480, 0.0
    %v1485 = vsel %vm1482, %v1417, %v1484
    %1487 = vset.pattern.permute.xlu0 0
    %1488 = vperm.xlu0 %1487, %v1344
    %v1489 = vpop.permute.xlu0 %1488
    %v1491 = vsel %vm1481, %v1489, %v1485
    %1492 = vst [vmem:[#allocation11] sm:$0x1] %v1491
    // Predicated region
    $region50: #{tpu_custom_call.1} parent=1 // pred_check
      _
    $region51: #{tpu_custom_call.1} parent=1 // pred_check_branch
      %1494 = sbr.rel (0) target = $region53
    $region52: #{tpu_custom_call.1} parent=1 // pred_region
      %s1496 = ssub.s32 16, 16
      %1497 = vsyncadd [#allocation5], %s1496
      %s1499 = sshll.u32 [#allocation11], 4
      %s1500 = int_to_ptr.vmem [resolvable:$true] %s1499
      %1502 = dma.vmem_to_hbm [thread:$0]  %s1500, 16, %s8, [#allocation5]
    $region53: #{tpu_custom_call.1} parent=1 // pred_fallthru
      _
    // Predicated region
    $region54: #{tpu_custom_call.1} parent=1 // pred_check
      _
    $region55: #{tpu_custom_call.1} parent=1 // pred_check_branch
      %1504 = sbr.rel (0) target = $region57
    $region56: #{tpu_custom_call.1} parent=1 // pred_region
      %1505 = dma.done [#allocation5], 16
    $region57: #{tpu_custom_call.1} parent=1 // pred_fallthru
      _
    %1506 = vsyncpa [#allocation4], 1
    %1507 = vsyncpa [#allocation7], 1
    %1508 = vsyncpa [#allocation10], 1
    %1509 = vsyncpa [#allocation5], 1

</llo_original>
